<compile_context>
chip_gen: v7x
topology: tpu7x:2x2x1
jax: 0.10.0
libtpu: 0.0.40
codegen_flags: <defaults>
</compile_context>

<pallas_src>
import jax
import jax.numpy as jnp
from jax import lax
from jax.experimental import pallas as pl
from jax.experimental.pallas import tpu as pltpu


def decoder_kernel(emb_ref,    # (T, H)     pre-gathered embedding rows (f32)
                   h0_ref,     # (1, H)     initial hidden (f32)
                   w_ref,      # (2, H, 3H) [W_ih^T | W_hh^T], gate order [r, z, n]
                   b_ref,      # (1, 4H)    [b_ir+b_hr | b_iz+b_hz | b_in | b_hn] (f32)
                   wout_ref,   # (H, O)     output projection, pre-transposed
                   bout_ref,   # (1, O)     output bias (f32)
                   logp_ref,   # out: (T, O) log-probabilities
                   hfin_ref):  # out: (1, H) final hidden
    T = emb_ref.shape[0]
    H = h0_ref.shape[1]

    # Loaded once; VMEM-resident for the whole decode.
    w_ih = w_ref[0]            # (H, 3H)
    w_hh = w_ref[1]            # (H, 3H)
    b = b_ref[...]             # (1, 4H)
    wout = wout_ref[...]       # (H, O)
    bout = bout_ref[...]       # (1, O)

    def step(t, h):
        # h: (1, H) f32 loop carry
        x = emb_ref[pl.ds(t, 1), :]                                   # (1, H) f32

        # GRU cell, PyTorch gate order [r, z, n]:
        #   r = sigmoid(W_ir x + b_ir + W_hr h + b_hr)
        #   z = sigmoid(W_iz x + b_iz + W_hz h + b_hz)
        #   n = tanh  (W_in x + b_in + r * (W_hn h + b_hn))
        #   h' = (1 - z) * n + z * h
        gx = jnp.dot(x.astype(w_ih.dtype), w_ih,
                     preferred_element_type=jnp.float32)              # (1, 3H)
        gh = jnp.dot(h.astype(w_hh.dtype), w_hh,
                     preferred_element_type=jnp.float32)              # (1, 3H)

        rz = jax.nn.sigmoid(gx[:, :2 * H] + gh[:, :2 * H] + b[:, :2 * H])
        r = rz[:, :H]
        z = rz[:, H:]
        n = jnp.tanh(gx[:, 2 * H:] + b[:, 2 * H:3 * H]
                     + r * (gh[:, 2 * H:] + b[:, 3 * H:]))
        h_new = (1.0 - z) * n + z * h                                 # (1, H) f32

        # Linear(H, O) then numerically-stable LogSoftmax(dim=1)
        logits = jnp.dot(h_new.astype(wout.dtype), wout,
                         preferred_element_type=jnp.float32) + bout   # (1, O)
        m = jnp.max(logits, axis=1, keepdims=True)
        s = logits - m
        lse = jnp.log(jnp.sum(jnp.exp(s), axis=1, keepdims=True))

        logp_ref[pl.ds(t, 1), :] = s - lse
        return h_new

    h_final = lax.fori_loop(0, T, step, h0_ref[...], unroll=True)
    hfin_ref[...] = h_final


def _vmem_budget_bytes(T, H, O, gate_w_dtype, out_w_dtype):
    bpe = lambda d: jnp.dtype(d).itemsize
    resident = (T * H * 4                       # embedding rows
                + H * 4                         # h0
                + 2 * H * 3 * H * bpe(gate_w_dtype)
                + 4 * H * 4
                + H * O * bpe(out_w_dtype)
                + O * 4
                + T * O * 4                     # log-prob slab
                + H * 4)                        # final hidden
    # 2x for Pallas double-buffering + fixed headroom, capped below v5e scoped max.
    return int(min(2 * resident + (4 << 20), 100 << 20))


def decoder_forward_seq(params, tokens, hidden):
    """Teacher-forced multi-step decode in ONE pallas_call (single grid step).

    tokens: (T,) int32, hidden: (1, 1, H).
    Returns (log_probs (T, O), final hidden (1, 1, H)).
    """
    H = params["hidden_size"]
    O = params["output_size"]
    T = int(tokens.shape[0])

    toks = jnp.clip(tokens.reshape((T,)).astype(jnp.int32), 0, O - 1)
    emb_rows = jnp.take(params["embedding"], toks, axis=0)            # (T, H) f32
    h_in = hidden.reshape(1, H).astype(jnp.float32)

    w_cat = params["w_cat"]
    w_out = params["w_out"]

    grid = (1,)
    in_specs = [
        pl.BlockSpec((T, H), lambda i: (0, 0)),             # embedding rows
        pl.BlockSpec((1, H), lambda i: (0, 0)),              # initial hidden
        pl.BlockSpec((2, H, 3 * H), lambda i: (0, 0, 0)),    # stacked gate weights
        pl.BlockSpec((1, 4 * H), lambda i: (0, 0)),          # packed gate biases
        pl.BlockSpec((H, O), lambda i: (0, 0)),              # W_out^T
        pl.BlockSpec((1, O), lambda i: (0, 0)),               # b_out
    ]
    out_specs = [
        pl.BlockSpec((T, O), lambda i: (0, 0)),               # log-prob slab
        pl.BlockSpec((1, H), lambda i: (0, 0)),                # final hidden
    ]

    logp, h_out = pl.pallas_call(
        decoder_kernel,
        out_shape=(jax.ShapeDtypeStruct((T, O), jnp.float32),
                   jax.ShapeDtypeStruct((1, H), jnp.float32)),
        grid=grid,
        in_specs=in_specs,
        out_specs=out_specs,
        compiler_params=pltpu.CompilerParams(
            dimension_semantics=("arbitrary",),
            vmem_limit_bytes=_vmem_budget_bytes(T, H, O, w_cat.dtype, w_out.dtype)),
    )(emb_rows, h_in, w_cat, params["b_cat"], w_out, params["b_out"])

    return logp, h_out.reshape(1, 1, H)


def decoder_forward(params, token, hidden):
    """Single-step forward matching DecoderRNN.forward(input, hidden, _)."""
    logp, h_out = decoder_forward_seq(params, token.reshape((1,)), hidden)
    return logp, h_out


# ----------------------------- parameters --------------------------------- #

def init_params(key, hidden_size, output_size):
    """Parameters in PyTorch layout (nn.Embedding / nn.GRU / nn.Linear)."""
    ks = jax.random.split(key, 7)
    s = 1.0 / jnp.sqrt(jnp.float32(hidden_size))
    u = lambda k, shape: jax.random.uniform(k, shape, jnp.float32, -s, s)
    H, O = hidden_size, output_size
    return {
        "hidden_size": H,
        "output_size": O,
        "embedding": jax.random.normal(ks[0], (O, H), jnp.float32),
        "gru_w_ih": u(ks[1], (3 * H, H)),     # [W_ir; W_iz; W_in]
        "gru_w_hh": u(ks[2], (3 * H, H)),     # [W_hr; W_hz; W_hn]
        "gru_b_ih": u(ks[3], (3 * H,)),
        "gru_b_hh": u(ks[4], (3 * H,)),
        "out_w": u(ks[5], (O, H)),
        "out_b": u(ks[6], (O,)),
    }


def pack_params(raw, gate_weight_dtype=jnp.float32, out_weight_dtype=jnp.bfloat16):
    """Pack PyTorch-layout params into the kernel layout.

    Gate weights default to f32 (recurrent precision); the large output
    projection defaults to bf16 (halved DMA/VMEM, f32 MXU accumulation).
    """
    H, O = raw["hidden_size"], raw["output_size"]
    w_ih_t = raw["gru_w_ih"].T                                        # (H, 3H) [r|z|n]
    w_hh_t = raw["gru_w_hh"].T                                        # (H, 3H)
    w_cat = jnp.stack([w_ih_t, w_hh_t], axis=0).astype(gate_weight_dtype)
    b_ih, b_hh = raw["gru_b_ih"], raw["gru_b_hh"]
    b_cat = jnp.concatenate(
        [b_ih[:2 * H] + b_hh[:2 * H],   # pre-summed r/z biases (2H)
         b_ih[2 * H:],                  # b_in (H)
         b_hh[2 * H:]],                 # b_hn (H) -- kept separate for r*(...)
        axis=0).reshape(1, 4 * H).astype(jnp.float32)
    return {
        "hidden_size": H,
        "output_size": O,
        "embedding": raw["embedding"].astype(jnp.float32),            # gathered in wrapper
        "w_cat": w_cat,                                               # (2, H, 3H)
        "b_cat": b_cat,                                               # (1, 4H)
        "w_out": raw["out_w"].T.astype(out_weight_dtype),             # (H, O)
        "b_out": raw["out_b"].reshape(1, O).astype(jnp.float32),      # (1, O)
    }


# ------------------------------ reference --------------------------------- #

def decoder_ref_seq(raw, tokens, hidden):
    """Pure-JAX reference with PyTorch GRU semantics (for validation)."""
    H = raw["hidden_size"]
    h = hidden.reshape(1, H).astype(jnp.float32)
    w_ih, w_hh = raw["gru_w_ih"], raw["gru_w_hh"]
    b_ih, b_hh = raw["gru_b_ih"], raw["gru_b_hh"]
    outs = []
    for t in range(int(tokens.shape[0])):
        x = raw["embedding"][int(tokens[t])].reshape(1, H)
        gi = x @ w_ih.T + b_ih
        gh = h @ w_hh.T + b_hh
        r = jax.nn.sigmoid(gi[:, :H] + gh[:, :H])
        z = jax.nn.sigmoid(gi[:, H:2 * H] + gh[:, H:2 * H])
        n = jnp.tanh(gi[:, 2 * H:] + r * gh[:, 2 * H:])
        h = (1.0 - z) * n + z * h
        logits = h @ raw["out_w"].T + raw["out_b"]
        outs.append(jax.nn.log_softmax(logits, axis=1))
    return jnp.concatenate(outs, axis=0), h.reshape(1, 1, H)


if __name__ == "__main__":
    H, O = 32, 128
    key = jax.random.PRNGKey(0)
    raw = init_params(key, H, O)

    tokens = jnp.array([7, 3, 19, 0, 127, 42], dtype=jnp.int32)   # T = 6 teacher-forced steps
    hidden0 = jnp.zeros((1, 1, H), dtype=jnp.float32)             # == DecoderRNN.initHidden()

    ref_logp, ref_h = decoder_ref_seq(raw, tokens, hidden0)

    # f32 everything: tight validation of the fused kernel.
    params_f32 = pack_params(raw, gate_weight_dtype=jnp.float32,
                             out_weight_dtype=jnp.float32)
    logp_seq, h_seq = decoder_forward_seq(params_f32, tokens, hidden0)

    # Single-step path (module forward signature), chained from Python.
    logp1, h1 = decoder_forward(params_f32, tokens[:1], hidden0)
    logp2, h2 = decoder_forward(params_f32, tokens[1:2], h1)
    jax.block_until_ready((logp_seq, h_seq, logp1, h1, logp2, h2))

    assert jnp.allclose(logp_seq, ref_logp, atol=1e-4), "seq log-probs mismatch (f32)"
    assert jnp.allclose(h_seq, ref_h, atol=1e-4), "seq hidden mismatch (f32)"
    assert jnp.allclose(logp1, ref_logp[:1], atol=1e-4), "step-1 log-probs mismatch"
    assert jnp.allclose(logp2, ref_logp[1:2], atol=1e-4), "step-2 log-probs mismatch"

    # Default packing: bf16 output projection, f32 recurrent path (loose tolerance).
    params_def = pack_params(raw)
    logp_bf16, h_bf16 = decoder_forward_seq(params_def, tokens, hidden0)
    jax.block_until_ready((logp_bf16, h_bf16))
    assert jnp.allclose(logp_bf16, ref_logp, atol=5e-2), "seq log-probs mismatch (bf16 W_out)"
    assert jnp.allclose(h_bf16, ref_h, atol=1e-4), "seq hidden mismatch (bf16 W_out)"

    print("KERNEL_OK")
</pallas_src>

<mosaic_0001>
module attributes {stable_mosaic.version = 11 : i64} {
  func.func @decoder_kernel(%arg0: i32, %arg1: memref<6x32xf32, #tpu.memory_space<vmem>>, %arg2: memref<1x32xf32, #tpu.memory_space<vmem>>, %arg3: memref<2x32x96xf32, #tpu.memory_space<vmem>>, %arg4: memref<1x128xf32, #tpu.memory_space<vmem>>, %arg5: memref<32x128xf32, #tpu.memory_space<vmem>>, %arg6: memref<1x128xf32, #tpu.memory_space<vmem>>, %arg7: memref<6x128xf32, #tpu.memory_space<vmem>>, %arg8: memref<1x32xf32, #tpu.memory_space<vmem>>) attributes {dimension_semantics = [#tpu.dimension_semantics<arbitrary>], iteration_bounds = array<i64: 1>, scalar_prefetch = 0 : i64, scratch_operands = 0 : i64, tpu.core_type = #tpu.core_type<tc>, window_params = [{pipeline_mode = #tpu.pipeline_mode<synchronous>, transform_indices = @transform_0, window_bounds = array<i64: 6, 32>}, {pipeline_mode = #tpu.pipeline_mode<synchronous>, transform_indices = @transform_1, window_bounds = array<i64: 1, 32>}, {pipeline_mode = #tpu.pipeline_mode<synchronous>, transform_indices = @transform_2, window_bounds = array<i64: 2, 32, 96>}, {pipeline_mode = #tpu.pipeline_mode<synchronous>, transform_indices = @transform_3, window_bounds = array<i64: 1, 128>}, {pipeline_mode = #tpu.pipeline_mode<synchronous>, transform_indices = @transform_4, window_bounds = array<i64: 32, 128>}, {pipeline_mode = #tpu.pipeline_mode<synchronous>, transform_indices = @transform_5, window_bounds = array<i64: 1, 128>}, {pipeline_mode = #tpu.pipeline_mode<synchronous>, transform_indices = @transform_6, window_bounds = array<i64: 6, 128>}, {pipeline_mode = #tpu.pipeline_mode<synchronous>, transform_indices = @transform_7, window_bounds = array<i64: 1, 32>}]} {
    %c0 = arith.constant 0 : index
    %c0_0 = arith.constant 0 : index
    %c0_1 = arith.constant 0 : index
    %0 = vector.load %arg3[%c0, %c0_0, %c0_1] : memref<2x32x96xf32, #tpu.memory_space<vmem>>, vector<1x32x96xf32>
    %1 = vector.shape_cast %0 : vector<1x32x96xf32> to vector<32x96xf32>
    %c1 = arith.constant 1 : index
    %c0_2 = arith.constant 0 : index
    %c0_3 = arith.constant 0 : index
    %2 = vector.load %arg3[%c1, %c0_2, %c0_3] : memref<2x32x96xf32, #tpu.memory_space<vmem>>, vector<1x32x96xf32>
    %3 = vector.shape_cast %2 : vector<1x32x96xf32> to vector<32x96xf32>
    %c0_4 = arith.constant 0 : index
    %c0_5 = arith.constant 0 : index
    %4 = vector.load %arg4[%c0_4, %c0_5] : memref<1x128xf32, #tpu.memory_space<vmem>>, vector<1x128xf32>
    %c0_6 = arith.constant 0 : index
    %c0_7 = arith.constant 0 : index
    %5 = vector.load %arg5[%c0_6, %c0_7] : memref<32x128xf32, #tpu.memory_space<vmem>>, vector<32x128xf32>
    %c0_8 = arith.constant 0 : index
    %c0_9 = arith.constant 0 : index
    %6 = vector.load %arg6[%c0_8, %c0_9] : memref<1x128xf32, #tpu.memory_space<vmem>>, vector<1x128xf32>
    %c0_10 = arith.constant 0 : index
    %c0_11 = arith.constant 0 : index
    %7 = vector.load %arg2[%c0_10, %c0_11] : memref<1x32xf32, #tpu.memory_space<vmem>>, vector<1x32xf32>
    %c0_i32 = arith.constant 0 : i32
    %8 = arith.index_cast %c0_i32 : i32 to index
    %c0_12 = arith.constant 0 : index
    %9 = vector.load %arg1[%8, %c0_12] : memref<6x32xf32, #tpu.memory_space<vmem>>, vector<1x32xf32>
    %cst = arith.constant dense<0.000000e+00> : vector<1x96xf32>
    %10 = tpu.matmul %9, %1, %cst {dimension_numbers = #tpu.dot_dimension_numbers<[1], [0], [0], [1], [0, 0, 1, 1], [], []>} : vector<1x32xf32>, vector<32x96xf32>, vector<1x96xf32> -> vector<1x96xf32>
    %cst_13 = arith.constant dense<0.000000e+00> : vector<1x96xf32>
    %11 = tpu.matmul %7, %3, %cst_13 {dimension_numbers = #tpu.dot_dimension_numbers<[1], [0], [0], [1], [0, 0, 1, 1], [], []>} : vector<1x32xf32>, vector<32x96xf32>, vector<1x96xf32> -> vector<1x96xf32>
    %12 = vector.extract_strided_slice %10 {offsets = [0, 0], sizes = [1, 64], strides = [1, 1]} : vector<1x96xf32> to vector<1x64xf32>
    %13 = vector.extract_strided_slice %11 {offsets = [0, 0], sizes = [1, 64], strides = [1, 1]} : vector<1x96xf32> to vector<1x64xf32>
    %14 = arith.addf %12, %13 : vector<1x64xf32>
    %15 = vector.extract_strided_slice %4 {offsets = [0, 0], sizes = [1, 64], strides = [1, 1]} : vector<1x128xf32> to vector<1x64xf32>
    %16 = arith.addf %14, %15 : vector<1x64xf32>
    %17 = arith.negf %16 : vector<1x64xf32>
    %18 = math.exp %17 : vector<1x64xf32>
    %cst_14 = arith.constant 1.000000e+00 : f32
    %19 = vector.broadcast %cst_14 : f32 to vector<1x64xf32>
    %20 = arith.addf %19, %18 : vector<1x64xf32>
    %21 = arith.divf %19, %20 : vector<1x64xf32>
    %22 = vector.extract_strided_slice %21 {offsets = [0, 0], sizes = [1, 32], strides = [1, 1]} : vector<1x64xf32> to vector<1x32xf32>
    %23 = vector.extract_strided_slice %21 {offsets = [0, 32], sizes = [1, 32], strides = [1, 1]} : vector<1x64xf32> to vector<1x32xf32>
    %24 = vector.extract_strided_slice %10 {offsets = [0, 64], sizes = [1, 32], strides = [1, 1]} : vector<1x96xf32> to vector<1x32xf32>
    %25 = vector.extract_strided_slice %4 {offsets = [0, 64], sizes = [1, 32], strides = [1, 1]} : vector<1x128xf32> to vector<1x32xf32>
    %26 = arith.addf %24, %25 : vector<1x32xf32>
    %27 = vector.extract_strided_slice %11 {offsets = [0, 64], sizes = [1, 32], strides = [1, 1]} : vector<1x96xf32> to vector<1x32xf32>
    %28 = vector.extract_strided_slice %4 {offsets = [0, 96], sizes = [1, 32], strides = [1, 1]} : vector<1x128xf32> to vector<1x32xf32>
    %29 = arith.addf %27, %28 : vector<1x32xf32>
    %30 = arith.mulf %22, %29 : vector<1x32xf32>
    %31 = arith.addf %26, %30 : vector<1x32xf32>
    %32 = math.tanh %31 : vector<1x32xf32>
    %cst_15 = arith.constant 1.000000e+00 : f32
    %33 = vector.broadcast %cst_15 : f32 to vector<1x32xf32>
    %34 = arith.subf %33, %23 : vector<1x32xf32>
    %35 = arith.mulf %34, %32 : vector<1x32xf32>
    %36 = arith.mulf %23, %7 : vector<1x32xf32>
    %37 = arith.addf %35, %36 : vector<1x32xf32>
    %cst_16 = arith.constant dense<0.000000e+00> : vector<1x128xf32>
    %38 = tpu.matmul %37, %5, %cst_16 {dimension_numbers = #tpu.dot_dimension_numbers<[1], [0], [0], [1], [0, 0, 1, 1], [], []>} : vector<1x32xf32>, vector<32x128xf32>, vector<1x128xf32> -> vector<1x128xf32>
    %39 = arith.addf %38, %6 : vector<1x128xf32>
    %cst_17 = arith.constant dense<0xFF800000> : vector<1xf32>
    %40 = vector.multi_reduction <maximumf>, %39, %cst_17 [1] : vector<1x128xf32> to vector<1xf32>
    %41 = vector.shape_cast %40 : vector<1xf32> to vector<1x1xf32>
    %42 = vector.broadcast %41 : vector<1x1xf32> to vector<1x128xf32>
    %43 = arith.subf %39, %42 : vector<1x128xf32>
    %44 = math.exp %43 : vector<1x128xf32>
    %cst_18 = arith.constant dense<0.000000e+00> : vector<1xf32>
    %45 = vector.multi_reduction <add>, %44, %cst_18 [1] : vector<1x128xf32> to vector<1xf32>
    %46 = vector.shape_cast %45 : vector<1xf32> to vector<1x1xf32>
    %47 = math.log %46 : vector<1x1xf32>
    %48 = vector.broadcast %47 : vector<1x1xf32> to vector<1x128xf32>
    %49 = arith.subf %43, %48 : vector<1x128xf32>
    %50 = arith.index_cast %c0_i32 : i32 to index
    %c0_19 = arith.constant 0 : index
    %51 = vector.load %arg7[%50, %c0_19] : memref<6x128xf32, #tpu.memory_space<vmem>>, vector<1x128xf32>
    tpu.vector_store %arg7[%50, %c0_19], %49 {strides = array<i32>} : memref<6x128xf32, #tpu.memory_space<vmem>>, vector<1x128xf32>,
    %c1_i32 = arith.constant 1 : i32
    %52 = arith.index_cast %c1_i32 : i32 to index
    %c0_20 = arith.constant 0 : index
    %53 = vector.load %arg1[%52, %c0_20] : memref<6x32xf32, #tpu.memory_space<vmem>>, vector<1x32xf32>
    %cst_21 = arith.constant dense<0.000000e+00> : vector<1x96xf32>
    %54 = tpu.matmul %53, %1, %cst_21 {dimension_numbers = #tpu.dot_dimension_numbers<[1], [0], [0], [1], [0, 0, 1, 1], [], []>} : vector<1x32xf32>, vector<32x96xf32>, vector<1x96xf32> -> vector<1x96xf32>
    %cst_22 = arith.constant dense<0.000000e+00> : vector<1x96xf32>
    %55 = tpu.matmul %37, %3, %cst_22 {dimension_numbers = #tpu.dot_dimension_numbers<[1], [0], [0], [1], [0, 0, 1, 1], [], []>} : vector<1x32xf32>, vector<32x96xf32>, vector<1x96xf32> -> vector<1x96xf32>
    %56 = vector.extract_strided_slice %54 {offsets = [0, 0], sizes = [1, 64], strides = [1, 1]} : vector<1x96xf32> to vector<1x64xf32>
    %57 = vector.extract_strided_slice %55 {offsets = [0, 0], sizes = [1, 64], strides = [1, 1]} : vector<1x96xf32> to vector<1x64xf32>
    %58 = arith.addf %56, %57 : vector<1x64xf32>
    %59 = vector.extract_strided_slice %4 {offsets = [0, 0], sizes = [1, 64], strides = [1, 1]} : vector<1x128xf32> to vector<1x64xf32>
    %60 = arith.addf %58, %59 : vector<1x64xf32>
    %61 = arith.negf %60 : vector<1x64xf32>
    %62 = math.exp %61 : vector<1x64xf32>
    %cst_23 = arith.constant 1.000000e+00 : f32
    %63 = vector.broadcast %cst_23 : f32 to vector<1x64xf32>
    %64 = arith.addf %63, %62 : vector<1x64xf32>
    %65 = arith.divf %63, %64 : vector<1x64xf32>
    %66 = vector.extract_strided_slice %65 {offsets = [0, 0], sizes = [1, 32], strides = [1, 1]} : vector<1x64xf32> to vector<1x32xf32>
    %67 = vector.extract_strided_slice %65 {offsets = [0, 32], sizes = [1, 32], strides = [1, 1]} : vector<1x64xf32> to vector<1x32xf32>
    %68 = vector.extract_strided_slice %54 {offsets = [0, 64], sizes = [1, 32], strides = [1, 1]} : vector<1x96xf32> to vector<1x32xf32>
    %69 = vector.extract_strided_slice %4 {offsets = [0, 64], sizes = [1, 32], strides = [1, 1]} : vector<1x128xf32> to vector<1x32xf32>
    %70 = arith.addf %68, %69 : vector<1x32xf32>
    %71 = vector.extract_strided_slice %55 {offsets = [0, 64], sizes = [1, 32], strides = [1, 1]} : vector<1x96xf32> to vector<1x32xf32>
    %72 = vector.extract_strided_slice %4 {offsets = [0, 96], sizes = [1, 32], strides = [1, 1]} : vector<1x128xf32> to vector<1x32xf32>
    %73 = arith.addf %71, %72 : vector<1x32xf32>
    %74 = arith.mulf %66, %73 : vector<1x32xf32>
    %75 = arith.addf %70, %74 : vector<1x32xf32>
    %76 = math.tanh %75 : vector<1x32xf32>
    %cst_24 = arith.constant 1.000000e+00 : f32
    %77 = vector.broadcast %cst_24 : f32 to vector<1x32xf32>
    %78 = arith.subf %77, %67 : vector<1x32xf32>
    %79 = arith.mulf %78, %76 : vector<1x32xf32>
    %80 = arith.mulf %67, %37 : vector<1x32xf32>
    %81 = arith.addf %79, %80 : vector<1x32xf32>
    %cst_25 = arith.constant dense<0.000000e+00> : vector<1x128xf32>
    %82 = tpu.matmul %81, %5, %cst_25 {dimension_numbers = #tpu.dot_dimension_numbers<[1], [0], [0], [1], [0, 0, 1, 1], [], []>} : vector<1x32xf32>, vector<32x128xf32>, vector<1x128xf32> -> vector<1x128xf32>
    %83 = arith.addf %82, %6 : vector<1x128xf32>
    %cst_26 = arith.constant dense<0xFF800000> : vector<1xf32>
    %84 = vector.multi_reduction <maximumf>, %83, %cst_26 [1] : vector<1x128xf32> to vector<1xf32>
    %85 = vector.shape_cast %84 : vector<1xf32> to vector<1x1xf32>
    %86 = vector.broadcast %85 : vector<1x1xf32> to vector<1x128xf32>
    %87 = arith.subf %83, %86 : vector<1x128xf32>
    %88 = math.exp %87 : vector<1x128xf32>
    %cst_27 = arith.constant dense<0.000000e+00> : vector<1xf32>
    %89 = vector.multi_reduction <add>, %88, %cst_27 [1] : vector<1x128xf32> to vector<1xf32>
    %90 = vector.shape_cast %89 : vector<1xf32> to vector<1x1xf32>
    %91 = math.log %90 : vector<1x1xf32>
    %92 = vector.broadcast %91 : vector<1x1xf32> to vector<1x128xf32>
    %93 = arith.subf %87, %92 : vector<1x128xf32>
    %94 = arith.index_cast %c1_i32 : i32 to index
    %c0_28 = arith.constant 0 : index
    %95 = vector.load %arg7[%94, %c0_28] : memref<6x128xf32, #tpu.memory_space<vmem>>, vector<1x128xf32>
    tpu.vector_store %arg7[%94, %c0_28], %93 {strides = array<i32>} : memref<6x128xf32, #tpu.memory_space<vmem>>, vector<1x128xf32>,
    %c2_i32 = arith.constant 2 : i32
    %96 = arith.index_cast %c2_i32 : i32 to index
    %c0_29 = arith.constant 0 : index
    %97 = vector.load %arg1[%96, %c0_29] : memref<6x32xf32, #tpu.memory_space<vmem>>, vector<1x32xf32>
    %cst_30 = arith.constant dense<0.000000e+00> : vector<1x96xf32>
    %98 = tpu.matmul %97, %1, %cst_30 {dimension_numbers = #tpu.dot_dimension_numbers<[1], [0], [0], [1], [0, 0, 1, 1], [], []>} : vector<1x32xf32>, vector<32x96xf32>, vector<1x96xf32> -> vector<1x96xf32>
    %cst_31 = arith.constant dense<0.000000e+00> : vector<1x96xf32>
    %99 = tpu.matmul %81, %3, %cst_31 {dimension_numbers = #tpu.dot_dimension_numbers<[1], [0], [0], [1], [0, 0, 1, 1], [], []>} : vector<1x32xf32>, vector<32x96xf32>, vector<1x96xf32> -> vector<1x96xf32>
    %100 = vector.extract_strided_slice %98 {offsets = [0, 0], sizes = [1, 64], strides = [1, 1]} : vector<1x96xf32> to vector<1x64xf32>
    %101 = vector.extract_strided_slice %99 {offsets = [0, 0], sizes = [1, 64], strides = [1, 1]} : vector<1x96xf32> to vector<1x64xf32>
    %102 = arith.addf %100, %101 : vector<1x64xf32>
    %103 = vector.extract_strided_slice %4 {offsets = [0, 0], sizes = [1, 64], strides = [1, 1]} : vector<1x128xf32> to vector<1x64xf32>
    %104 = arith.addf %102, %103 : vector<1x64xf32>
    %105 = arith.negf %104 : vector<1x64xf32>
    %106 = math.exp %105 : vector<1x64xf32>
    %cst_32 = arith.constant 1.000000e+00 : f32
    %107 = vector.broadcast %cst_32 : f32 to vector<1x64xf32>
    %108 = arith.addf %107, %106 : vector<1x64xf32>
    %109 = arith.divf %107, %108 : vector<1x64xf32>
    %110 = vector.extract_strided_slice %109 {offsets = [0, 0], sizes = [1, 32], strides = [1, 1]} : vector<1x64xf32> to vector<1x32xf32>
    %111 = vector.extract_strided_slice %109 {offsets = [0, 32], sizes = [1, 32], strides = [1, 1]} : vector<1x64xf32> to vector<1x32xf32>
    %112 = vector.extract_strided_slice %98 {offsets = [0, 64], sizes = [1, 32], strides = [1, 1]} : vector<1x96xf32> to vector<1x32xf32>
    %113 = vector.extract_strided_slice %4 {offsets = [0, 64], sizes = [1, 32], strides = [1, 1]} : vector<1x128xf32> to vector<1x32xf32>
    %114 = arith.addf %112, %113 : vector<1x32xf32>
    %115 = vector.extract_strided_slice %99 {offsets = [0, 64], sizes = [1, 32], strides = [1, 1]} : vector<1x96xf32> to vector<1x32xf32>
    %116 = vector.extract_strided_slice %4 {offsets = [0, 96], sizes = [1, 32], strides = [1, 1]} : vector<1x128xf32> to vector<1x32xf32>
    %117 = arith.addf %115, %116 : vector<1x32xf32>
    %118 = arith.mulf %110, %117 : vector<1x32xf32>
    %119 = arith.addf %114, %118 : vector<1x32xf32>
    %120 = math.tanh %119 : vector<1x32xf32>
    %cst_33 = arith.constant 1.000000e+00 : f32
    %121 = vector.broadcast %cst_33 : f32 to vector<1x32xf32>
    %122 = arith.subf %121, %111 : vector<1x32xf32>
    %123 = arith.mulf %122, %120 : vector<1x32xf32>
    %124 = arith.mulf %111, %81 : vector<1x32xf32>
    %125 = arith.addf %123, %124 : vector<1x32xf32>
    %cst_34 = arith.constant dense<0.000000e+00> : vector<1x128xf32>
    %126 = tpu.matmul %125, %5, %cst_34 {dimension_numbers = #tpu.dot_dimension_numbers<[1], [0], [0], [1], [0, 0, 1, 1], [], []>} : vector<1x32xf32>, vector<32x128xf32>, vector<1x128xf32> -> vector<1x128xf32>
    %127 = arith.addf %126, %6 : vector<1x128xf32>
    %cst_35 = arith.constant dense<0xFF800000> : vector<1xf32>
    %128 = vector.multi_reduction <maximumf>, %127, %cst_35 [1] : vector<1x128xf32> to vector<1xf32>
    %129 = vector.shape_cast %128 : vector<1xf32> to vector<1x1xf32>
    %130 = vector.broadcast %129 : vector<1x1xf32> to vector<1x128xf32>
    %131 = arith.subf %127, %130 : vector<1x128xf32>
    %132 = math.exp %131 : vector<1x128xf32>
    %cst_36 = arith.constant dense<0.000000e+00> : vector<1xf32>
    %133 = vector.multi_reduction <add>, %132, %cst_36 [1] : vector<1x128xf32> to vector<1xf32>
    %134 = vector.shape_cast %133 : vector<1xf32> to vector<1x1xf32>
    %135 = math.log %134 : vector<1x1xf32>
    %136 = vector.broadcast %135 : vector<1x1xf32> to vector<1x128xf32>
    %137 = arith.subf %131, %136 : vector<1x128xf32>
    %138 = arith.index_cast %c2_i32 : i32 to index
    %c0_37 = arith.constant 0 : index
    %139 = vector.load %arg7[%138, %c0_37] : memref<6x128xf32, #tpu.memory_space<vmem>>, vector<1x128xf32>
    tpu.vector_store %arg7[%138, %c0_37], %137 {strides = array<i32>} : memref<6x128xf32, #tpu.memory_space<vmem>>, vector<1x128xf32>,
    %c3_i32 = arith.constant 3 : i32
    %140 = arith.index_cast %c3_i32 : i32 to index
    %c0_38 = arith.constant 0 : index
    %141 = vector.load %arg1[%140, %c0_38] : memref<6x32xf32, #tpu.memory_space<vmem>>, vector<1x32xf32>
    %cst_39 = arith.constant dense<0.000000e+00> : vector<1x96xf32>
    %142 = tpu.matmul %141, %1, %cst_39 {dimension_numbers = #tpu.dot_dimension_numbers<[1], [0], [0], [1], [0, 0, 1, 1], [], []>} : vector<1x32xf32>, vector<32x96xf32>, vector<1x96xf32> -> vector<1x96xf32>
    %cst_40 = arith.constant dense<0.000000e+00> : vector<1x96xf32>
    %143 = tpu.matmul %125, %3, %cst_40 {dimension_numbers = #tpu.dot_dimension_numbers<[1], [0], [0], [1], [0, 0, 1, 1], [], []>} : vector<1x32xf32>, vector<32x96xf32>, vector<1x96xf32> -> vector<1x96xf32>
    %144 = vector.extract_strided_slice %142 {offsets = [0, 0], sizes = [1, 64], strides = [1, 1]} : vector<1x96xf32> to vector<1x64xf32>
    %145 = vector.extract_strided_slice %143 {offsets = [0, 0], sizes = [1, 64], strides = [1, 1]} : vector<1x96xf32> to vector<1x64xf32>
    %146 = arith.addf %144, %145 : vector<1x64xf32>
    %147 = vector.extract_strided_slice %4 {offsets = [0, 0], sizes = [1, 64], strides = [1, 1]} : vector<1x128xf32> to vector<1x64xf32>
    %148 = arith.addf %146, %147 : vector<1x64xf32>
    %149 = arith.negf %148 : vector<1x64xf32>
    %150 = math.exp %149 : vector<1x64xf32>
    %cst_41 = arith.constant 1.000000e+00 : f32
    %151 = vector.broadcast %cst_41 : f32 to vector<1x64xf32>
    %152 = arith.addf %151, %150 : vector<1x64xf32>
    %153 = arith.divf %151, %152 : vector<1x64xf32>
    %154 = vector.extract_strided_slice %153 {offsets = [0, 0], sizes = [1, 32], strides = [1, 1]} : vector<1x64xf32> to vector<1x32xf32>
    %155 = vector.extract_strided_slice %153 {offsets = [0, 32], sizes = [1, 32], strides = [1, 1]} : vector<1x64xf32> to vector<1x32xf32>
    %156 = vector.extract_strided_slice %142 {offsets = [0, 64], sizes = [1, 32], strides = [1, 1]} : vector<1x96xf32> to vector<1x32xf32>
    %157 = vector.extract_strided_slice %4 {offsets = [0, 64], sizes = [1, 32], strides = [1, 1]} : vector<1x128xf32> to vector<1x32xf32>
    %158 = arith.addf %156, %157 : vector<1x32xf32>
    %159 = vector.extract_strided_slice %143 {offsets = [0, 64], sizes = [1, 32], strides = [1, 1]} : vector<1x96xf32> to vector<1x32xf32>
    %160 = vector.extract_strided_slice %4 {offsets = [0, 96], sizes = [1, 32], strides = [1, 1]} : vector<1x128xf32> to vector<1x32xf32>
    %161 = arith.addf %159, %160 : vector<1x32xf32>
    %162 = arith.mulf %154, %161 : vector<1x32xf32>
    %163 = arith.addf %158, %162 : vector<1x32xf32>
    %164 = math.tanh %163 : vector<1x32xf32>
    %cst_42 = arith.constant 1.000000e+00 : f32
    %165 = vector.broadcast %cst_42 : f32 to vector<1x32xf32>
    %166 = arith.subf %165, %155 : vector<1x32xf32>
    %167 = arith.mulf %166, %164 : vector<1x32xf32>
    %168 = arith.mulf %155, %125 : vector<1x32xf32>
    %169 = arith.addf %167, %168 : vector<1x32xf32>
    %cst_43 = arith.constant dense<0.000000e+00> : vector<1x128xf32>
    %170 = tpu.matmul %169, %5, %cst_43 {dimension_numbers = #tpu.dot_dimension_numbers<[1], [0], [0], [1], [0, 0, 1, 1], [], []>} : vector<1x32xf32>, vector<32x128xf32>, vector<1x128xf32> -> vector<1x128xf32>
    %171 = arith.addf %170, %6 : vector<1x128xf32>
    %cst_44 = arith.constant dense<0xFF800000> : vector<1xf32>
    %172 = vector.multi_reduction <maximumf>, %171, %cst_44 [1] : vector<1x128xf32> to vector<1xf32>
    %173 = vector.shape_cast %172 : vector<1xf32> to vector<1x1xf32>
    %174 = vector.broadcast %173 : vector<1x1xf32> to vector<1x128xf32>
    %175 = arith.subf %171, %174 : vector<1x128xf32>
    %176 = math.exp %175 : vector<1x128xf32>
    %cst_45 = arith.constant dense<0.000000e+00> : vector<1xf32>
    %177 = vector.multi_reduction <add>, %176, %cst_45 [1] : vector<1x128xf32> to vector<1xf32>
    %178 = vector.shape_cast %177 : vector<1xf32> to vector<1x1xf32>
    %179 = math.log %178 : vector<1x1xf32>
    %180 = vector.broadcast %179 : vector<1x1xf32> to vector<1x128xf32>
    %181 = arith.subf %175, %180 : vector<1x128xf32>
    %182 = arith.index_cast %c3_i32 : i32 to index
    %c0_46 = arith.constant 0 : index
    %183 = vector.load %arg7[%182, %c0_46] : memref<6x128xf32, #tpu.memory_space<vmem>>, vector<1x128xf32>
    tpu.vector_store %arg7[%182, %c0_46], %181 {strides = array<i32>} : memref<6x128xf32, #tpu.memory_space<vmem>>, vector<1x128xf32>,
    %c4_i32 = arith.constant 4 : i32
    %184 = arith.index_cast %c4_i32 : i32 to index
    %c0_47 = arith.constant 0 : index
    %185 = vector.load %arg1[%184, %c0_47] : memref<6x32xf32, #tpu.memory_space<vmem>>, vector<1x32xf32>
    %cst_48 = arith.constant dense<0.000000e+00> : vector<1x96xf32>
    %186 = tpu.matmul %185, %1, %cst_48 {dimension_numbers = #tpu.dot_dimension_numbers<[1], [0], [0], [1], [0, 0, 1, 1], [], []>} : vector<1x32xf32>, vector<32x96xf32>, vector<1x96xf32> -> vector<1x96xf32>
    %cst_49 = arith.constant dense<0.000000e+00> : vector<1x96xf32>
    %187 = tpu.matmul %169, %3, %cst_49 {dimension_numbers = #tpu.dot_dimension_numbers<[1], [0], [0], [1], [0, 0, 1, 1], [], []>} : vector<1x32xf32>, vector<32x96xf32>, vector<1x96xf32> -> vector<1x96xf32>
    %188 = vector.extract_strided_slice %186 {offsets = [0, 0], sizes = [1, 64], strides = [1, 1]} : vector<1x96xf32> to vector<1x64xf32>
    %189 = vector.extract_strided_slice %187 {offsets = [0, 0], sizes = [1, 64], strides = [1, 1]} : vector<1x96xf32> to vector<1x64xf32>
    %190 = arith.addf %188, %189 : vector<1x64xf32>
    %191 = vector.extract_strided_slice %4 {offsets = [0, 0], sizes = [1, 64], strides = [1, 1]} : vector<1x128xf32> to vector<1x64xf32>
    %192 = arith.addf %190, %191 : vector<1x64xf32>
    %193 = arith.negf %192 : vector<1x64xf32>
    %194 = math.exp %193 : vector<1x64xf32>
    %cst_50 = arith.constant 1.000000e+00 : f32
    %195 = vector.broadcast %cst_50 : f32 to vector<1x64xf32>
    %196 = arith.addf %195, %194 : vector<1x64xf32>
    %197 = arith.divf %195, %196 : vector<1x64xf32>
    %198 = vector.extract_strided_slice %197 {offsets = [0, 0], sizes = [1, 32], strides = [1, 1]} : vector<1x64xf32> to vector<1x32xf32>
    %199 = vector.extract_strided_slice %197 {offsets = [0, 32], sizes = [1, 32], strides = [1, 1]} : vector<1x64xf32> to vector<1x32xf32>
    %200 = vector.extract_strided_slice %186 {offsets = [0, 64], sizes = [1, 32], strides = [1, 1]} : vector<1x96xf32> to vector<1x32xf32>
    %201 = vector.extract_strided_slice %4 {offsets = [0, 64], sizes = [1, 32], strides = [1, 1]} : vector<1x128xf32> to vector<1x32xf32>
    %202 = arith.addf %200, %201 : vector<1x32xf32>
    %203 = vector.extract_strided_slice %187 {offsets = [0, 64], sizes = [1, 32], strides = [1, 1]} : vector<1x96xf32> to vector<1x32xf32>
    %204 = vector.extract_strided_slice %4 {offsets = [0, 96], sizes = [1, 32], strides = [1, 1]} : vector<1x128xf32> to vector<1x32xf32>
    %205 = arith.addf %203, %204 : vector<1x32xf32>
    %206 = arith.mulf %198, %205 : vector<1x32xf32>
    %207 = arith.addf %202, %206 : vector<1x32xf32>
    %208 = math.tanh %207 : vector<1x32xf32>
    %cst_51 = arith.constant 1.000000e+00 : f32
    %209 = vector.broadcast %cst_51 : f32 to vector<1x32xf32>
    %210 = arith.subf %209, %199 : vector<1x32xf32>
    %211 = arith.mulf %210, %208 : vector<1x32xf32>
    %212 = arith.mulf %199, %169 : vector<1x32xf32>
    %213 = arith.addf %211, %212 : vector<1x32xf32>
    %cst_52 = arith.constant dense<0.000000e+00> : vector<1x128xf32>
    %214 = tpu.matmul %213, %5, %cst_52 {dimension_numbers = #tpu.dot_dimension_numbers<[1], [0], [0], [1], [0, 0, 1, 1], [], []>} : vector<1x32xf32>, vector<32x128xf32>, vector<1x128xf32> -> vector<1x128xf32>
    %215 = arith.addf %214, %6 : vector<1x128xf32>
    %cst_53 = arith.constant dense<0xFF800000> : vector<1xf32>
    %216 = vector.multi_reduction <maximumf>, %215, %cst_53 [1] : vector<1x128xf32> to vector<1xf32>
    %217 = vector.shape_cast %216 : vector<1xf32> to vector<1x1xf32>
    %218 = vector.broadcast %217 : vector<1x1xf32> to vector<1x128xf32>
    %219 = arith.subf %215, %218 : vector<1x128xf32>
    %220 = math.exp %219 : vector<1x128xf32>
    %cst_54 = arith.constant dense<0.000000e+00> : vector<1xf32>
    %221 = vector.multi_reduction <add>, %220, %cst_54 [1] : vector<1x128xf32> to vector<1xf32>
    %222 = vector.shape_cast %221 : vector<1xf32> to vector<1x1xf32>
    %223 = math.log %222 : vector<1x1xf32>
    %224 = vector.broadcast %223 : vector<1x1xf32> to vector<1x128xf32>
    %225 = arith.subf %219, %224 : vector<1x128xf32>
    %226 = arith.index_cast %c4_i32 : i32 to index
    %c0_55 = arith.constant 0 : index
    %227 = vector.load %arg7[%226, %c0_55] : memref<6x128xf32, #tpu.memory_space<vmem>>, vector<1x128xf32>
    tpu.vector_store %arg7[%226, %c0_55], %225 {strides = array<i32>} : memref<6x128xf32, #tpu.memory_space<vmem>>, vector<1x128xf32>,
    %c5_i32 = arith.constant 5 : i32
    %228 = arith.index_cast %c5_i32 : i32 to index
    %c0_56 = arith.constant 0 : index
    %229 = vector.load %arg1[%228, %c0_56] : memref<6x32xf32, #tpu.memory_space<vmem>>, vector<1x32xf32>
    %cst_57 = arith.constant dense<0.000000e+00> : vector<1x96xf32>
    %230 = tpu.matmul %229, %1, %cst_57 {dimension_numbers = #tpu.dot_dimension_numbers<[1], [0], [0], [1], [0, 0, 1, 1], [], []>} : vector<1x32xf32>, vector<32x96xf32>, vector<1x96xf32> -> vector<1x96xf32>
    %cst_58 = arith.constant dense<0.000000e+00> : vector<1x96xf32>
    %231 = tpu.matmul %213, %3, %cst_58 {dimension_numbers = #tpu.dot_dimension_numbers<[1], [0], [0], [1], [0, 0, 1, 1], [], []>} : vector<1x32xf32>, vector<32x96xf32>, vector<1x96xf32> -> vector<1x96xf32>
    %232 = vector.extract_strided_slice %230 {offsets = [0, 0], sizes = [1, 64], strides = [1, 1]} : vector<1x96xf32> to vector<1x64xf32>
    %233 = vector.extract_strided_slice %231 {offsets = [0, 0], sizes = [1, 64], strides = [1, 1]} : vector<1x96xf32> to vector<1x64xf32>
    %234 = arith.addf %232, %233 : vector<1x64xf32>
    %235 = vector.extract_strided_slice %4 {offsets = [0, 0], sizes = [1, 64], strides = [1, 1]} : vector<1x128xf32> to vector<1x64xf32>
    %236 = arith.addf %234, %235 : vector<1x64xf32>
    %237 = arith.negf %236 : vector<1x64xf32>
    %238 = math.exp %237 : vector<1x64xf32>
    %cst_59 = arith.constant 1.000000e+00 : f32
    %239 = vector.broadcast %cst_59 : f32 to vector<1x64xf32>
    %240 = arith.addf %239, %238 : vector<1x64xf32>
    %241 = arith.divf %239, %240 : vector<1x64xf32>
    %242 = vector.extract_strided_slice %241 {offsets = [0, 0], sizes = [1, 32], strides = [1, 1]} : vector<1x64xf32> to vector<1x32xf32>
    %243 = vector.extract_strided_slice %241 {offsets = [0, 32], sizes = [1, 32], strides = [1, 1]} : vector<1x64xf32> to vector<1x32xf32>
    %244 = vector.extract_strided_slice %230 {offsets = [0, 64], sizes = [1, 32], strides = [1, 1]} : vector<1x96xf32> to vector<1x32xf32>
    %245 = vector.extract_strided_slice %4 {offsets = [0, 64], sizes = [1, 32], strides = [1, 1]} : vector<1x128xf32> to vector<1x32xf32>
    %246 = arith.addf %244, %245 : vector<1x32xf32>
    %247 = vector.extract_strided_slice %231 {offsets = [0, 64], sizes = [1, 32], strides = [1, 1]} : vector<1x96xf32> to vector<1x32xf32>
    %248 = vector.extract_strided_slice %4 {offsets = [0, 96], sizes = [1, 32], strides = [1, 1]} : vector<1x128xf32> to vector<1x32xf32>
    %249 = arith.addf %247, %248 : vector<1x32xf32>
    %250 = arith.mulf %242, %249 : vector<1x32xf32>
    %251 = arith.addf %246, %250 : vector<1x32xf32>
    %252 = math.tanh %251 : vector<1x32xf32>
    %cst_60 = arith.constant 1.000000e+00 : f32
    %253 = vector.broadcast %cst_60 : f32 to vector<1x32xf32>
    %254 = arith.subf %253, %243 : vector<1x32xf32>
    %255 = arith.mulf %254, %252 : vector<1x32xf32>
    %256 = arith.mulf %243, %213 : vector<1x32xf32>
    %257 = arith.addf %255, %256 : vector<1x32xf32>
    %cst_61 = arith.constant dense<0.000000e+00> : vector<1x128xf32>
    %258 = tpu.matmul %257, %5, %cst_61 {dimension_numbers = #tpu.dot_dimension_numbers<[1], [0], [0], [1], [0, 0, 1, 1], [], []>} : vector<1x32xf32>, vector<32x128xf32>, vector<1x128xf32> -> vector<1x128xf32>
    %259 = arith.addf %258, %6 : vector<1x128xf32>
    %cst_62 = arith.constant dense<0xFF800000> : vector<1xf32>
    %260 = vector.multi_reduction <maximumf>, %259, %cst_62 [1] : vector<1x128xf32> to vector<1xf32>
    %261 = vector.shape_cast %260 : vector<1xf32> to vector<1x1xf32>
    %262 = vector.broadcast %261 : vector<1x1xf32> to vector<1x128xf32>
    %263 = arith.subf %259, %262 : vector<1x128xf32>
    %264 = math.exp %263 : vector<1x128xf32>
    %cst_63 = arith.constant dense<0.000000e+00> : vector<1xf32>
    %265 = vector.multi_reduction <add>, %264, %cst_63 [1] : vector<1x128xf32> to vector<1xf32>
    %266 = vector.shape_cast %265 : vector<1xf32> to vector<1x1xf32>
    %267 = math.log %266 : vector<1x1xf32>
    %268 = vector.broadcast %267 : vector<1x1xf32> to vector<1x128xf32>
    %269 = arith.subf %263, %268 : vector<1x128xf32>
    %270 = arith.index_cast %c5_i32 : i32 to index
    %c0_64 = arith.constant 0 : index
    %271 = vector.load %arg7[%270, %c0_64] : memref<6x128xf32, #tpu.memory_space<vmem>>, vector<1x128xf32>
    tpu.vector_store %arg7[%270, %c0_64], %269 {strides = array<i32>} : memref<6x128xf32, #tpu.memory_space<vmem>>, vector<1x128xf32>,
    %c6_i32 = arith.constant 6 : i32
    %c0_65 = arith.constant 0 : index
    %c0_66 = arith.constant 0 : index
    %272 = vector.load %arg8[%c0_65, %c0_66] : memref<1x32xf32, #tpu.memory_space<vmem>>, vector<1x32xf32>
    tpu.vector_store %arg8[%c0_65, %c0_66], %257 {strides = array<i32>} : memref<1x32xf32, #tpu.memory_space<vmem>>, vector<1x32xf32>,
    return
  }
  func.func @transform_0(%arg0: i32) -> (i32, i32) {
    %c0_i32 = arith.constant 0 : i32
    %c0_i32_0 = arith.constant 0 : i32
    %c0_i32_1 = arith.constant 0 : i32
    return %c0_i32, %c0_i32_0 : i32, i32
  }
  func.func @transform_1(%arg0: i32) -> (i32, i32) {
    %c0_i32 = arith.constant 0 : i32
    %c0_i32_0 = arith.constant 0 : i32
    %c0_i32_1 = arith.constant 0 : i32
    return %c0_i32, %c0_i32_0 : i32, i32
  }
  func.func @transform_2(%arg0: i32) -> (i32, i32, i32) {
    %c0_i32 = arith.constant 0 : i32
    %c0_i32_0 = arith.constant 0 : i32
    %c0_i32_1 = arith.constant 0 : i32
    %c0_i32_2 = arith.constant 0 : i32
    return %c0_i32, %c0_i32_0, %c0_i32_1 : i32, i32, i32
  }
  func.func @transform_3(%arg0: i32) -> (i32, i32) {
    %c0_i32 = arith.constant 0 : i32
    %c0_i32_0 = arith.constant 0 : i32
    %c0_i32_1 = arith.constant 0 : i32
    return %c0_i32, %c0_i32_0 : i32, i32
  }
  func.func @transform_4(%arg0: i32) -> (i32, i32) {
    %c0_i32 = arith.constant 0 : i32
    %c0_i32_0 = arith.constant 0 : i32
    %c0_i32_1 = arith.constant 0 : i32
    return %c0_i32, %c0_i32_0 : i32, i32
  }
  func.func @transform_5(%arg0: i32) -> (i32, i32) {
    %c0_i32 = arith.constant 0 : i32
    %c0_i32_0 = arith.constant 0 : i32
    %c0_i32_1 = arith.constant 0 : i32
    return %c0_i32, %c0_i32_0 : i32, i32
  }
  func.func @transform_6(%arg0: i32) -> (i32, i32) {
    %c0_i32 = arith.constant 0 : i32
    %c0_i32_0 = arith.constant 0 : i32
    %c0_i32_1 = arith.constant 0 : i32
    return %c0_i32, %c0_i32_0 : i32, i32
  }
  func.func @transform_7(%arg0: i32) -> (i32, i32) {
    %c0_i32 = arith.constant 0 : i32
    %c0_i32_0 = arith.constant 0 : i32
    %c0_i32_1 = arith.constant 0 : i32
    return %c0_i32, %c0_i32_0 : i32, i32
  }
}

</mosaic_0001>

<llo_original>
// kernel: tpu_custom_call.1
$region0: #{tpu_custom_call.1}
  #allocation0 [shape = 'u32[]', space=smem, size = 0x4, offset = 0x4, fixed_abs, tag = 'smem constant byte address 0x4 - core index']
  #allocation1 [shape = 'u32[144,128]{1,0:T(1,128)}', space=vmem, size = 0x12000, scoped, tag = 'internal scratch']
  %s0 = inlined_call_operand.hbm [shape: f32[6,32], index: 0, kind: input, shape index: {}]
  %s1 = inlined_call_operand.vmem [shape: f32[1,32], index: 1, kind: input, shape index: {}]
  %s2 = inlined_call_operand.hbm [shape: f32[2,32,96], index: 2, kind: input, shape index: {}]
  %s3 = inlined_call_operand.vmem [shape: f32[1,128], index: 3, kind: input, shape index: {}]
  %s4 = inlined_call_operand.hbm [shape: f32[32,128], index: 4, kind: input, shape index: {}]
  %s5 = inlined_call_operand.vmem [shape: f32[1,128], index: 5, kind: input, shape index: {}]
  %s6 = inlined_call_operand.hbm [shape: f32[6,128], index: 6, kind: output, shape index: {0}]
  %s7 = inlined_call_operand.hbm [shape: f32[1,32], index: 7, kind: output, shape index: {1}]
  %8 = xla_tuple %s6, %s7
  %s9 = sld [smem:[#allocation0]]
  $region54: #{tpu_custom_call.1} parent=0
    _
  %s11 = ssub.s32 1, %s9
  %s12 = scalar_select 0, %s11, %s9
  $region1: #{tpu_custom_call.1} parent=0
    #allocation2 [shape = 'u8[4096]{0}', space=vmem, size = 0x1000, scoped, tag = 'input window, operand 0, single buffered']
    #allocation3 [shape = 's32[1]{0}', space=sflag, size = 0x4, scoped, tag = 'scoped memory for tpu_custom_call.1']
    #allocation4 [shape = 's32[1]{0}', space=sflag, size = 0x4, scoped, tag = 'scoped memory for tpu_custom_call.1']
    #allocation5 [shape = 'u8[32768]{0}', space=vmem, size = 0x8000, scoped, tag = 'input window, operand 2, single buffered']
    #allocation6 [shape = 's32[1]{0}', space=sflag, size = 0x4, scoped, tag = 'scoped memory for tpu_custom_call.1']
    #allocation7 [shape = 'u8[16384]{0}', space=vmem, size = 0x4000, scoped, tag = 'input window, operand 4, single buffered']
    #allocation8 [shape = 'u8[4096]{0}', space=vmem, size = 0x1000, scoped, tag = 'output window, operand 0, single buffered']
    #allocation9 [shape = 'u8[512]{0}', space=vmem, size = 0x400, scoped, tag = 'output window, operand 1, single buffered']
    #allocation10 [shape = 's32[1]{0}', space=sflag, size = 0x4, scoped, tag = 'scoped memory for tpu_custom_call.1']
    %13 = vsyncpa [#allocation3], 0
    %14 = vsyncpa [#allocation6], 0
    %15 = vsyncpa [#allocation4], 0
    %16 = vsyncpa [#allocation10], 0
    // Predicated region
    $region2: #{tpu_custom_call.1} parent=1 // pred_check
      _
    $region3: #{tpu_custom_call.1} parent=1 // pred_check_branch
      %18 = sbr.rel (0) target = $region5
    $region4: #{tpu_custom_call.1} parent=1 // pred_region
      %s20 = ssub.s32 128, 128
      %21 = vsyncadd [#allocation3], %s20
      %s23 = sshll.u32 [#allocation2], 4
      %s24 = int_to_ptr.vmem [resolvable:$true] %s23
      %26 = dma.hbm_to_vmem [thread:$0]  %s0, 128, %s24, [#allocation3]
    $region5: #{tpu_custom_call.1} parent=1 // pred_fallthru
      _
    // Predicated region
    $region6: #{tpu_custom_call.1} parent=1 // pred_check
      _
    $region7: #{tpu_custom_call.1} parent=1 // pred_check_branch
      %28 = sbr.rel (0) target = $region9
    $region8: #{tpu_custom_call.1} parent=1 // pred_region
      _
    $region9: #{tpu_custom_call.1} parent=1 // pred_fallthru
      _
    // Predicated region
    $region10: #{tpu_custom_call.1} parent=1 // pred_check
      _
    $region11: #{tpu_custom_call.1} parent=1 // pred_check_branch
      %30 = sbr.rel (0) target = $region13
    $region12: #{tpu_custom_call.1} parent=1 // pred_region
      %s32 = ssub.s32 1024, 1024
      %33 = vsyncadd [#allocation6], %s32
      %s34 = sshll.u32 [#allocation5], 4
      %s35 = int_to_ptr.vmem [resolvable:$true] %s34
      %40 = dma.hbm_to_vmem [thread:$0]  %s2, 1024, %s35, [#allocation6], 128, 128, 8
    $region13: #{tpu_custom_call.1} parent=1 // pred_fallthru
      _
    // Predicated region
    $region14: #{tpu_custom_call.1} parent=1 // pred_check
      _
    $region15: #{tpu_custom_call.1} parent=1 // pred_check_branch
      %42 = sbr.rel (0) target = $region17
    $region16: #{tpu_custom_call.1} parent=1 // pred_region
      _
    $region17: #{tpu_custom_call.1} parent=1 // pred_fallthru
      _
    // Predicated region
    $region18: #{tpu_custom_call.1} parent=1 // pred_check
      _
    $region19: #{tpu_custom_call.1} parent=1 // pred_check_branch
      %44 = sbr.rel (0) target = $region21
    $region20: #{tpu_custom_call.1} parent=1 // pred_region
      %s46 = ssub.s32 512, 512
      %47 = vsyncadd [#allocation6], %s46
      %s48 = sshll.u32 [#allocation7], 4
      %s49 = int_to_ptr.vmem [resolvable:$true] %s48
      %54 = dma.hbm_to_vmem [thread:$0]  %s4, 512, %s49, [#allocation6], 128, 128, 8
    $region21: #{tpu_custom_call.1} parent=1 // pred_fallthru
      _
    // Predicated region
    $region22: #{tpu_custom_call.1} parent=1 // pred_check
      _
    $region23: #{tpu_custom_call.1} parent=1 // pred_check_branch
      %56 = sbr.rel (0) target = $region25
    $region24: #{tpu_custom_call.1} parent=1 // pred_region
      _
    $region25: #{tpu_custom_call.1} parent=1 // pred_fallthru
      _
    // Predicated region
    $region26: #{tpu_custom_call.1} parent=1 // pred_check
      _
    $region27: #{tpu_custom_call.1} parent=1 // pred_check_branch
      %58 = sbr.rel (0) target = $region29
    $region28: #{tpu_custom_call.1} parent=1 // pred_region
      %59 = dma.done [#allocation3], 128
    $region29: #{tpu_custom_call.1} parent=1 // pred_fallthru
      _
    // Predicated region
    $region30: #{tpu_custom_call.1} parent=1 // pred_check
      _
    $region31: #{tpu_custom_call.1} parent=1 // pred_check_branch
      %61 = sbr.rel (0) target = $region33
    $region32: #{tpu_custom_call.1} parent=1 // pred_region
      %62 = dma.done [#allocation6], 1024
    $region33: #{tpu_custom_call.1} parent=1 // pred_fallthru
      _
    // Predicated region
    $region34: #{tpu_custom_call.1} parent=1 // pred_check
      _
    $region35: #{tpu_custom_call.1} parent=1 // pred_check_branch
      %64 = sbr.rel (0) target = $region37
    $region36: #{tpu_custom_call.1} parent=1 // pred_region
      %65 = dma.done [#allocation6], 512
    $region37: #{tpu_custom_call.1} parent=1 // pred_fallthru
      _
    %v66 = vld [vmem:[#allocation5] sm:$0xff]
    %v67 = vld [vmem:[#allocation5 + $0x8] sm:$0xff]
    %v68 = vld [vmem:[#allocation5 + $0x10] sm:$0xff]
    %v69 = vld [vmem:[#allocation5 + $0x18] sm:$0xff]
    %s70 = scalar_lea.vmem [#allocation5], 32
    %v71 = vld [vmem:[%s70] sm:$0xff]
    %v72 = vld [vmem:[%s70 + $0x8] sm:$0xff]
    %v73 = vld [vmem:[%s70 + $0x10] sm:$0xff]
    %v74 = vld [vmem:[%s70 + $0x18] sm:$0xff]
    %v75 = vld [vmem:[%s3] sm:$0x1]
    %v76 = vld [vmem:[#allocation7] sm:$0xff]
    %v77 = vld [vmem:[#allocation7 + $0x8] sm:$0xff]
    %v78 = vld [vmem:[#allocation7 + $0x10] sm:$0xff]
    %v79 = vld [vmem:[#allocation7 + $0x18] sm:$0xff]
    %v80 = vld [vmem:[%s5] sm:$0x1]
    %v81 = vld [vmem:[%s1] sm:$0x1]
    %v82 = vld [vmem:[#allocation2] sm:$0x1]
    %vm83 = vcmask 261120
    %v85 = vsel %vm83, %v82, 0
    %87 = vmatprep.subr.mxu0 0.0
    %88 = vmatpush1.msra.mxu0 %v66
    %89 = vmatprep.subr.mxu0 0.0
    %90 = vmatpush1.msra.mxu0 %v67
    %91 = vmatprep.subr.mxu0 0.0
    %92 = vmatpush1.msra.mxu0 %v68
    %93 = vmatprep.subr.mxu0 0.0
    %94 = vmatpush1.msra.mxu0 %v69
    %95 = vmatprep.subr.mxu0 0.0
    %96 = vmatpush1.msra.mxu0 0.0
    %97 = vmatprep.subr.mxu0 0.0
    %98 = vmatpush1.msra.mxu0 0.0
    %99 = vmatprep.subr.mxu0 0.0
    %100 = vmatpush1.msra.mxu0 0.0
    %101 = vmatprep.subr.mxu0 0.0
    %102 = vmatpush1.msra.mxu0 0.0
    %103 = vmatprep.subr.mxu0 0.0
    %104 = vmatpush1.msra.mxu0 0.0
    %105 = vmatprep.subr.mxu0 0.0
    %106 = vmatpush1.msra.mxu0 0.0
    %107 = vmatprep.subr.mxu0 0.0
    %108 = vmatpush1.msra.mxu0 0.0
    %109 = vmatprep.subr.mxu0 0.0
    %110 = vmatpush1.msra.mxu0 0.0
    %111 = vmatprep.subr.mxu0 0.0
    %112 = vmatpush1.msra.mxu0 0.0
    %113 = vmatprep.subr.mxu0 0.0
    %114 = vmatpush1.msra.mxu0 0.0
    %115 = vmatprep.subr.mxu0 0.0
    %116 = vmatpush1.msra.mxu0 0.0
    %117 = vmatprep.subr.mxu0 0.0
    %118 = vmatpush1.msra.mxu0 0.0
    %119 = vmatprep.subr.mxu0 0.0
    %120 = vmatpush1.msra.mxu0 0.0
    %121 = vmatprep.subr.mxu0 0.0
    %122 = vmatpush1.msra.mxu0 0.0
    %123 = vmatprep.subr.mxu0 0.0
    %124 = vmatpush1.msra.mxu0 0.0
    %125 = vmatprep.subr.mxu0 0.0
    %126 = vmatpush1.msra.mxu0 0.0
    %127 = vmatprep.subr.mxu0 0.0
    %128 = vmatpush1.msra.mxu0 0.0
    %129 = vmatprep.subr.mxu0 0.0
    %130 = vmatpush1.msra.mxu0 0.0
    %131 = vmatprep.subr.mxu0 0.0
    %132 = vmatpush1.msra.mxu0 0.0
    %133 = vmatprep.subr.mxu0 0.0
    %134 = vmatpush1.msra.mxu0 0.0
    %135 = vmatprep.subr.mxu0 0.0
    %136 = vmatpush1.msra.mxu0 0.0
    %137 = vmatprep.subr.mxu0 0.0
    %138 = vmatpush1.msra.mxu0 0.0
    %139 = vmatprep.subr.mxu0 0.0
    %140 = vmatpush1.msra.mxu0 0.0
    %141 = vmatprep.subr.mxu0 0.0
    %142 = vmatpush1.msra.mxu0 0.0
    %143 = vmatprep.subr.mxu0 0.0
    %144 = vmatpush1.msra.mxu0 0.0
    %145 = vmatprep.subr.mxu0 0.0
    %146 = vmatpush1.msra.mxu0 0.0
    %147 = vmatprep.subr.mxu0 0.0
    %148 = vmatpush1.msra.mxu0 0.0
    %149 = vmatprep.subr.mxu0 0.0
    %150 = vmatpush1.msra.mxu0 0.0
    %151 = vmatprep.mubr.f32.mxu0 0.0
    %152 = vmatmul.mubr.f32.gmra.mrb[0].mxu0 %v85
    %v153 = vpop.f32.mrb[0].mxu0
    %v154 = vadd.f32 0.0, %v153
    %v155 = vpop.f32.mrb[0].mxu0
    %156 = vdwg.mxu0
    %v158 = vsel %vm83, %v81, 0
    %160 = vmatprep.subr.mxu0 0.0
    %161 = vmatpush1.msra.mxu0 %v71
    %162 = vmatprep.subr.mxu0 0.0
    %163 = vmatpush1.msra.mxu0 %v72
    %164 = vmatprep.subr.mxu0 0.0
    %165 = vmatpush1.msra.mxu0 %v73
    %166 = vmatprep.subr.mxu0 0.0
    %167 = vmatpush1.msra.mxu0 %v74
    %168 = vmatprep.subr.mxu0 0.0
    %169 = vmatpush1.msra.mxu0 0.0
    %170 = vmatprep.subr.mxu0 0.0
    %171 = vmatpush1.msra.mxu0 0.0
    %172 = vmatprep.subr.mxu0 0.0
    %173 = vmatpush1.msra.mxu0 0.0
    %174 = vmatprep.subr.mxu0 0.0
    %175 = vmatpush1.msra.mxu0 0.0
    %176 = vmatprep.subr.mxu0 0.0
    %177 = vmatpush1.msra.mxu0 0.0
    %178 = vmatprep.subr.mxu0 0.0
    %179 = vmatpush1.msra.mxu0 0.0
    %180 = vmatprep.subr.mxu0 0.0
    %181 = vmatpush1.msra.mxu0 0.0
    %182 = vmatprep.subr.mxu0 0.0
    %183 = vmatpush1.msra.mxu0 0.0
    %184 = vmatprep.subr.mxu0 0.0
    %185 = vmatpush1.msra.mxu0 0.0
    %186 = vmatprep.subr.mxu0 0.0
    %187 = vmatpush1.msra.mxu0 0.0
    %188 = vmatprep.subr.mxu0 0.0
    %189 = vmatpush1.msra.mxu0 0.0
    %190 = vmatprep.subr.mxu0 0.0
    %191 = vmatpush1.msra.mxu0 0.0
    %192 = vmatprep.subr.mxu0 0.0
    %193 = vmatpush1.msra.mxu0 0.0
    %194 = vmatprep.subr.mxu0 0.0
    %195 = vmatpush1.msra.mxu0 0.0
    %196 = vmatprep.subr.mxu0 0.0
    %197 = vmatpush1.msra.mxu0 0.0
    %198 = vmatprep.subr.mxu0 0.0
    %199 = vmatpush1.msra.mxu0 0.0
    %200 = vmatprep.subr.mxu0 0.0
    %201 = vmatpush1.msra.mxu0 0.0
    %202 = vmatprep.subr.mxu0 0.0
    %203 = vmatpush1.msra.mxu0 0.0
    %204 = vmatprep.subr.mxu0 0.0
    %205 = vmatpush1.msra.mxu0 0.0
    %206 = vmatprep.subr.mxu0 0.0
    %207 = vmatpush1.msra.mxu0 0.0
    %208 = vmatprep.subr.mxu0 0.0
    %209 = vmatpush1.msra.mxu0 0.0
    %210 = vmatprep.subr.mxu0 0.0
    %211 = vmatpush1.msra.mxu0 0.0
    %212 = vmatprep.subr.mxu0 0.0
    %213 = vmatpush1.msra.mxu0 0.0
    %214 = vmatprep.subr.mxu0 0.0
    %215 = vmatpush1.msra.mxu0 0.0
    %216 = vmatprep.subr.mxu0 0.0
    %217 = vmatpush1.msra.mxu0 0.0
    %218 = vmatprep.subr.mxu0 0.0
    %219 = vmatpush1.msra.mxu0 0.0
    %220 = vmatprep.subr.mxu0 0.0
    %221 = vmatpush1.msra.mxu0 0.0
    %222 = vmatprep.subr.mxu0 0.0
    %223 = vmatpush1.msra.mxu0 0.0
    %224 = vmatprep.mubr.f32.mxu0 0.0
    %225 = vmatmul.mubr.f32.gmra.mrb[0].mxu0 %v158
    %v226 = vpop.f32.mrb[0].mxu0
    %v227 = vadd.f32 0.0, %v226
    %v228 = vpop.f32.mrb[0].mxu0
    %229 = vdwg.mxu0
    %v230 = vadd.f32 %v154, %v227
    %v231 = vadd.f32 %v230, %v75
    %v232 = vxor.u32 %v231, 2147483648
    %v233 = vmul.f32 %v232, 1.442695
    %v234 = vpow.pop %v233
    %v235 = vadd.f32 %v234, 1.0
    %v236 = vrcp.pop %v235
    %v237 = vmul.f32 1.0, %v236
    %v238 = vadd.f32 %v154, %v75
    %v240 = vlaneseq
    %v241 = vshrl.u32 %v240, 7
    %v242 = vsub.s32 0, %v241
    %v243 = vrot.slane %v75, %v242
    %244 = vrot.lane.b32.xlu0 %v243, 96
    %v245 = vpop.permute.xlu0 %244
    %v247 = vadd.f32 %v227, %v245
    %249 = vrot.lane.b32.xlu0 %v247, 64
    %v250 = vpop.permute.xlu0 %249
    %v252 = vmul.f32 %v237, %v250
    %254 = vrot.lane.b32.xlu0 %v252, 64
    %v255 = vpop.permute.xlu0 %254
    %v257 = vadd.f32 %v238, %v255
    %v258 = vtanh.pop %v257
    %v259 = vsub.f32 1.0, %v237
    %261 = vrot.lane.b32.xlu0 %v258, 96
    %v262 = vpop.permute.xlu0 %261
    %v264 = vmul.f32 %v259, %v262
    %v265 = vlaneseq
    %v266 = vshrl.u32 %v265, 7
    %v267 = vsub.s32 0, %v266
    %v268 = vrot.slane %v81, %v267
    %269 = vrot.lane.b32.xlu0 %v268, 32
    %v270 = vpop.permute.xlu0 %269
    %v272 = vmul.f32 %v237, %v270
    %v273 = vadd.f32 %v264, %v272
    %275 = vrot.lane.b32.xlu0 %v273, 96
    %v276 = vpop.permute.xlu0 %275
    %v277 = vsel %vm83, %v276, 0
    %279 = vmatprep.subr.mxu0 0.0
    %280 = vmatpush1.msra.mxu0 %v76
    %281 = vmatprep.subr.mxu0 0.0
    %282 = vmatpush1.msra.mxu0 %v77
    %283 = vmatprep.subr.mxu0 0.0
    %284 = vmatpush1.msra.mxu0 %v78
    %285 = vmatprep.subr.mxu0 0.0
    %286 = vmatpush1.msra.mxu0 %v79
    %287 = vmatprep.subr.mxu0 0.0
    %288 = vmatpush1.msra.mxu0 0.0
    %289 = vmatprep.subr.mxu0 0.0
    %290 = vmatpush1.msra.mxu0 0.0
    %291 = vmatprep.subr.mxu0 0.0
    %292 = vmatpush1.msra.mxu0 0.0
    %293 = vmatprep.subr.mxu0 0.0
    %294 = vmatpush1.msra.mxu0 0.0
    %295 = vmatprep.subr.mxu0 0.0
    %296 = vmatpush1.msra.mxu0 0.0
    %297 = vmatprep.subr.mxu0 0.0
    %298 = vmatpush1.msra.mxu0 0.0
    %299 = vmatprep.subr.mxu0 0.0
    %300 = vmatpush1.msra.mxu0 0.0
    %301 = vmatprep.subr.mxu0 0.0
    %302 = vmatpush1.msra.mxu0 0.0
    %303 = vmatprep.subr.mxu0 0.0
    %304 = vmatpush1.msra.mxu0 0.0
    %305 = vmatprep.subr.mxu0 0.0
    %306 = vmatpush1.msra.mxu0 0.0
    %307 = vmatprep.subr.mxu0 0.0
    %308 = vmatpush1.msra.mxu0 0.0
    %309 = vmatprep.subr.mxu0 0.0
    %310 = vmatpush1.msra.mxu0 0.0
    %311 = vmatprep.subr.mxu0 0.0
    %312 = vmatpush1.msra.mxu0 0.0
    %313 = vmatprep.subr.mxu0 0.0
    %314 = vmatpush1.msra.mxu0 0.0
    %315 = vmatprep.subr.mxu0 0.0
    %316 = vmatpush1.msra.mxu0 0.0
    %317 = vmatprep.subr.mxu0 0.0
    %318 = vmatpush1.msra.mxu0 0.0
    %319 = vmatprep.subr.mxu0 0.0
    %320 = vmatpush1.msra.mxu0 0.0
    %321 = vmatprep.subr.mxu0 0.0
    %322 = vmatpush1.msra.mxu0 0.0
    %323 = vmatprep.subr.mxu0 0.0
    %324 = vmatpush1.msra.mxu0 0.0
    %325 = vmatprep.subr.mxu0 0.0
    %326 = vmatpush1.msra.mxu0 0.0
    %327 = vmatprep.subr.mxu0 0.0
    %328 = vmatpush1.msra.mxu0 0.0
    %329 = vmatprep.subr.mxu0 0.0
    %330 = vmatpush1.msra.mxu0 0.0
    %331 = vmatprep.subr.mxu0 0.0
    %332 = vmatpush1.msra.mxu0 0.0
    %333 = vmatprep.subr.mxu0 0.0
    %334 = vmatpush1.msra.mxu0 0.0
    %335 = vmatprep.subr.mxu0 0.0
    %336 = vmatpush1.msra.mxu0 0.0
    %337 = vmatprep.subr.mxu0 0.0
    %338 = vmatpush1.msra.mxu0 0.0
    %339 = vmatprep.subr.mxu0 0.0
    %340 = vmatpush1.msra.mxu0 0.0
    %341 = vmatprep.subr.mxu0 0.0
    %342 = vmatpush1.msra.mxu0 0.0
    %343 = vmatprep.mubr.f32.mxu0 0.0
    %344 = vmatmul.mubr.f32.gmra.mrb[0].mxu0 %v277
    %v345 = vpop.f32.mrb[0].mxu0
    %v346 = vadd.f32 %v80, %v345
    %v347 = vpop.f32.mrb[0].mxu0
    %348 = vdwg.mxu0
    %vm349 = vcmask 1040384
    %v350 = vsel %vm349, %v346, -inf
    %351 = vmax.xlane.f32.xlu0 %v350
    %v352 = vpop.xlane.xlu0 %351
    %v353 = vsub.f32 %v346, %v352
    %v354 = vmul.f32 %v353, 1.442695
    %v355 = vpow.pop %v354
    %v356 = vsel %vm349, %v355, 0.0
    %357 = vadd.xlane.f32.xlu0 %v356
    %v358 = vpop.xlane.xlu0 %357
    %v359 = vlog2.pop %v358
    %v360 = vmul.f32 %v359, 0.6931472
    %v361 = vsub.f32 %v353, %v360
    %362 = vst [vmem:[#allocation8] sm:$0x1] %v361
    %v363 = vld [vmem:[#allocation2 + $0x1] sm:$0x1]
    %v365 = vsel %vm83, %v363, 0
    %367 = vmatprep.subr.mxu0 0.0
    %368 = vmatpush1.msra.mxu0 %v66
    %369 = vmatprep.subr.mxu0 0.0
    %370 = vmatpush1.msra.mxu0 %v67
    %371 = vmatprep.subr.mxu0 0.0
    %372 = vmatpush1.msra.mxu0 %v68
    %373 = vmatprep.subr.mxu0 0.0
    %374 = vmatpush1.msra.mxu0 %v69
    %375 = vmatprep.subr.mxu0 0.0
    %376 = vmatpush1.msra.mxu0 0.0
    %377 = vmatprep.subr.mxu0 0.0
    %378 = vmatpush1.msra.mxu0 0.0
    %379 = vmatprep.subr.mxu0 0.0
    %380 = vmatpush1.msra.mxu0 0.0
    %381 = vmatprep.subr.mxu0 0.0
    %382 = vmatpush1.msra.mxu0 0.0
    %383 = vmatprep.subr.mxu0 0.0
    %384 = vmatpush1.msra.mxu0 0.0
    %385 = vmatprep.subr.mxu0 0.0
    %386 = vmatpush1.msra.mxu0 0.0
    %387 = vmatprep.subr.mxu0 0.0
    %388 = vmatpush1.msra.mxu0 0.0
    %389 = vmatprep.subr.mxu0 0.0
    %390 = vmatpush1.msra.mxu0 0.0
    %391 = vmatprep.subr.mxu0 0.0
    %392 = vmatpush1.msra.mxu0 0.0
    %393 = vmatprep.subr.mxu0 0.0
    %394 = vmatpush1.msra.mxu0 0.0
    %395 = vmatprep.subr.mxu0 0.0
    %396 = vmatpush1.msra.mxu0 0.0
    %397 = vmatprep.subr.mxu0 0.0
    %398 = vmatpush1.msra.mxu0 0.0
    %399 = vmatprep.subr.mxu0 0.0
    %400 = vmatpush1.msra.mxu0 0.0
    %401 = vmatprep.subr.mxu0 0.0
    %402 = vmatpush1.msra.mxu0 0.0
    %403 = vmatprep.subr.mxu0 0.0
    %404 = vmatpush1.msra.mxu0 0.0
    %405 = vmatprep.subr.mxu0 0.0
    %406 = vmatpush1.msra.mxu0 0.0
    %407 = vmatprep.subr.mxu0 0.0
    %408 = vmatpush1.msra.mxu0 0.0
    %409 = vmatprep.subr.mxu0 0.0
    %410 = vmatpush1.msra.mxu0 0.0
    %411 = vmatprep.subr.mxu0 0.0
    %412 = vmatpush1.msra.mxu0 0.0
    %413 = vmatprep.subr.mxu0 0.0
    %414 = vmatpush1.msra.mxu0 0.0
    %415 = vmatprep.subr.mxu0 0.0
    %416 = vmatpush1.msra.mxu0 0.0
    %417 = vmatprep.subr.mxu0 0.0
    %418 = vmatpush1.msra.mxu0 0.0
    %419 = vmatprep.subr.mxu0 0.0
    %420 = vmatpush1.msra.mxu0 0.0
    %421 = vmatprep.subr.mxu0 0.0
    %422 = vmatpush1.msra.mxu0 0.0
    %423 = vmatprep.subr.mxu0 0.0
    %424 = vmatpush1.msra.mxu0 0.0
    %425 = vmatprep.subr.mxu0 0.0
    %426 = vmatpush1.msra.mxu0 0.0
    %427 = vmatprep.subr.mxu0 0.0
    %428 = vmatpush1.msra.mxu0 0.0
    %429 = vmatprep.subr.mxu0 0.0
    %430 = vmatpush1.msra.mxu0 0.0
    %431 = vmatprep.mubr.f32.mxu0 0.0
    %432 = vmatmul.mubr.f32.gmra.mrb[0].mxu0 %v365
    %v433 = vpop.f32.mrb[0].mxu0
    %v434 = vadd.f32 0.0, %v433
    %v435 = vpop.f32.mrb[0].mxu0
    %436 = vdwg.mxu0
    %437 = vmatprep.subr.mxu0 0.0
    %438 = vmatpush1.msra.mxu0 %v71
    %439 = vmatprep.subr.mxu0 0.0
    %440 = vmatpush1.msra.mxu0 %v72
    %441 = vmatprep.subr.mxu0 0.0
    %442 = vmatpush1.msra.mxu0 %v73
    %443 = vmatprep.subr.mxu0 0.0
    %444 = vmatpush1.msra.mxu0 %v74
    %445 = vmatprep.subr.mxu0 0.0
    %446 = vmatpush1.msra.mxu0 0.0
    %447 = vmatprep.subr.mxu0 0.0
    %448 = vmatpush1.msra.mxu0 0.0
    %449 = vmatprep.subr.mxu0 0.0
    %450 = vmatpush1.msra.mxu0 0.0
    %451 = vmatprep.subr.mxu0 0.0
    %452 = vmatpush1.msra.mxu0 0.0
    %453 = vmatprep.subr.mxu0 0.0
    %454 = vmatpush1.msra.mxu0 0.0
    %455 = vmatprep.subr.mxu0 0.0
    %456 = vmatpush1.msra.mxu0 0.0
    %457 = vmatprep.subr.mxu0 0.0
    %458 = vmatpush1.msra.mxu0 0.0
    %459 = vmatprep.subr.mxu0 0.0
    %460 = vmatpush1.msra.mxu0 0.0
    %461 = vmatprep.subr.mxu0 0.0
    %462 = vmatpush1.msra.mxu0 0.0
    %463 = vmatprep.subr.mxu0 0.0
    %464 = vmatpush1.msra.mxu0 0.0
    %465 = vmatprep.subr.mxu0 0.0
    %466 = vmatpush1.msra.mxu0 0.0
    %467 = vmatprep.subr.mxu0 0.0
    %468 = vmatpush1.msra.mxu0 0.0
    %469 = vmatprep.subr.mxu0 0.0
    %470 = vmatpush1.msra.mxu0 0.0
    %471 = vmatprep.subr.mxu0 0.0
    %472 = vmatpush1.msra.mxu0 0.0
    %473 = vmatprep.subr.mxu0 0.0
    %474 = vmatpush1.msra.mxu0 0.0
    %475 = vmatprep.subr.mxu0 0.0
    %476 = vmatpush1.msra.mxu0 0.0
    %477 = vmatprep.subr.mxu0 0.0
    %478 = vmatpush1.msra.mxu0 0.0
    %479 = vmatprep.subr.mxu0 0.0
    %480 = vmatpush1.msra.mxu0 0.0
    %481 = vmatprep.subr.mxu0 0.0
    %482 = vmatpush1.msra.mxu0 0.0
    %483 = vmatprep.subr.mxu0 0.0
    %484 = vmatpush1.msra.mxu0 0.0
    %485 = vmatprep.subr.mxu0 0.0
    %486 = vmatpush1.msra.mxu0 0.0
    %487 = vmatprep.subr.mxu0 0.0
    %488 = vmatpush1.msra.mxu0 0.0
    %489 = vmatprep.subr.mxu0 0.0
    %490 = vmatpush1.msra.mxu0 0.0
    %491 = vmatprep.subr.mxu0 0.0
    %492 = vmatpush1.msra.mxu0 0.0
    %493 = vmatprep.subr.mxu0 0.0
    %494 = vmatpush1.msra.mxu0 0.0
    %495 = vmatprep.subr.mxu0 0.0
    %496 = vmatpush1.msra.mxu0 0.0
    %497 = vmatprep.subr.mxu0 0.0
    %498 = vmatpush1.msra.mxu0 0.0
    %499 = vmatprep.subr.mxu0 0.0
    %500 = vmatpush1.msra.mxu0 0.0
    %501 = vmatprep.mubr.f32.mxu0 0.0
    %502 = vmatmul.mubr.f32.gmra.mrb[0].mxu0 %v277
    %v503 = vpop.f32.mrb[0].mxu0
    %v504 = vadd.f32 0.0, %v503
    %v505 = vpop.f32.mrb[0].mxu0
    %506 = vdwg.mxu0
    %v507 = vadd.f32 %v434, %v504
    %v508 = vadd.f32 %v507, %v75
    %v509 = vxor.u32 %v508, 2147483648
    %v510 = vmul.f32 %v509, 1.442695
    %v511 = vpow.pop %v510
    %v512 = vadd.f32 %v511, 1.0
    %v513 = vrcp.pop %v512
    %v514 = vmul.f32 1.0, %v513
    %v515 = vadd.f32 %v434, %v75
    %v516 = vadd.f32 %v504, %v245
    %518 = vrot.lane.b32.xlu0 %v516, 64
    %v519 = vpop.permute.xlu0 %518
    %v521 = vmul.f32 %v514, %v519
    %523 = vrot.lane.b32.xlu0 %v521, 64
    %v524 = vpop.permute.xlu0 %523
    %v526 = vadd.f32 %v515, %v524
    %v527 = vtanh.pop %v526
    %v528 = vsub.f32 1.0, %v514
    %530 = vrot.lane.b32.xlu0 %v527, 96
    %v531 = vpop.permute.xlu0 %530
    %v533 = vmul.f32 %v528, %v531
    %v534 = vmul.f32 %v514, %v273
    %v535 = vadd.f32 %v533, %v534
    %537 = vrot.lane.b32.xlu0 %v535, 96
    %v538 = vpop.permute.xlu0 %537
    %v539 = vsel %vm83, %v538, 0
    %541 = vmatprep.subr.mxu0 0.0
    %542 = vmatpush1.msra.mxu0 %v76
    %543 = vmatprep.subr.mxu0 0.0
    %544 = vmatpush1.msra.mxu0 %v77
    %545 = vmatprep.subr.mxu0 0.0
    %546 = vmatpush1.msra.mxu0 %v78
    %547 = vmatprep.subr.mxu0 0.0
    %548 = vmatpush1.msra.mxu0 %v79
    %549 = vmatprep.subr.mxu0 0.0
    %550 = vmatpush1.msra.mxu0 0.0
    %551 = vmatprep.subr.mxu0 0.0
    %552 = vmatpush1.msra.mxu0 0.0
    %553 = vmatprep.subr.mxu0 0.0
    %554 = vmatpush1.msra.mxu0 0.0
    %555 = vmatprep.subr.mxu0 0.0
    %556 = vmatpush1.msra.mxu0 0.0
    %557 = vmatprep.subr.mxu0 0.0
    %558 = vmatpush1.msra.mxu0 0.0
    %559 = vmatprep.subr.mxu0 0.0
    %560 = vmatpush1.msra.mxu0 0.0
    %561 = vmatprep.subr.mxu0 0.0
    %562 = vmatpush1.msra.mxu0 0.0
    %563 = vmatprep.subr.mxu0 0.0
    %564 = vmatpush1.msra.mxu0 0.0
    %565 = vmatprep.subr.mxu0 0.0
    %566 = vmatpush1.msra.mxu0 0.0
    %567 = vmatprep.subr.mxu0 0.0
    %568 = vmatpush1.msra.mxu0 0.0
    %569 = vmatprep.subr.mxu0 0.0
    %570 = vmatpush1.msra.mxu0 0.0
    %571 = vmatprep.subr.mxu0 0.0
    %572 = vmatpush1.msra.mxu0 0.0
    %573 = vmatprep.subr.mxu0 0.0
    %574 = vmatpush1.msra.mxu0 0.0
    %575 = vmatprep.subr.mxu0 0.0
    %576 = vmatpush1.msra.mxu0 0.0
    %577 = vmatprep.subr.mxu0 0.0
    %578 = vmatpush1.msra.mxu0 0.0
    %579 = vmatprep.subr.mxu0 0.0
    %580 = vmatpush1.msra.mxu0 0.0
    %581 = vmatprep.subr.mxu0 0.0
    %582 = vmatpush1.msra.mxu0 0.0
    %583 = vmatprep.subr.mxu0 0.0
    %584 = vmatpush1.msra.mxu0 0.0
    %585 = vmatprep.subr.mxu0 0.0
    %586 = vmatpush1.msra.mxu0 0.0
    %587 = vmatprep.subr.mxu0 0.0
    %588 = vmatpush1.msra.mxu0 0.0
    %589 = vmatprep.subr.mxu0 0.0
    %590 = vmatpush1.msra.mxu0 0.0
    %591 = vmatprep.subr.mxu0 0.0
    %592 = vmatpush1.msra.mxu0 0.0
    %593 = vmatprep.subr.mxu0 0.0
    %594 = vmatpush1.msra.mxu0 0.0
    %595 = vmatprep.subr.mxu0 0.0
    %596 = vmatpush1.msra.mxu0 0.0
    %597 = vmatprep.subr.mxu0 0.0
    %598 = vmatpush1.msra.mxu0 0.0
    %599 = vmatprep.subr.mxu0 0.0
    %600 = vmatpush1.msra.mxu0 0.0
    %601 = vmatprep.subr.mxu0 0.0
    %602 = vmatpush1.msra.mxu0 0.0
    %603 = vmatprep.subr.mxu0 0.0
    %604 = vmatpush1.msra.mxu0 0.0
    %605 = vmatprep.mubr.f32.mxu0 0.0
    %606 = vmatmul.mubr.f32.gmra.mrb[0].mxu0 %v539
    %v607 = vpop.f32.mrb[0].mxu0
    %v608 = vadd.f32 %v80, %v607
    %v609 = vpop.f32.mrb[0].mxu0
    %610 = vdwg.mxu0
    %v611 = vsel %vm349, %v608, -inf
    %612 = vmax.xlane.f32.xlu0 %v611
    %v613 = vpop.xlane.xlu0 %612
    %v614 = vsub.f32 %v608, %v613
    %v615 = vmul.f32 %v614, 1.442695
    %v616 = vpow.pop %v615
    %v617 = vsel %vm349, %v616, 0.0
    %618 = vadd.xlane.f32.xlu0 %v617
    %v619 = vpop.xlane.xlu0 %618
    %v620 = vlog2.pop %v619
    %v621 = vmul.f32 %v620, 0.6931472
    %v622 = vsub.f32 %v614, %v621
    %623 = vst [vmem:[#allocation8 + $0x1] sm:$0x1] %v622
    %v624 = vld [vmem:[#allocation2 + $0x2] sm:$0x1]
    %v626 = vsel %vm83, %v624, 0
    %628 = vmatprep.subr.mxu0 0.0
    %629 = vmatpush1.msra.mxu0 %v66
    %630 = vmatprep.subr.mxu0 0.0
    %631 = vmatpush1.msra.mxu0 %v67
    %632 = vmatprep.subr.mxu0 0.0
    %633 = vmatpush1.msra.mxu0 %v68
    %634 = vmatprep.subr.mxu0 0.0
    %635 = vmatpush1.msra.mxu0 %v69
    %636 = vmatprep.subr.mxu0 0.0
    %637 = vmatpush1.msra.mxu0 0.0
    %638 = vmatprep.subr.mxu0 0.0
    %639 = vmatpush1.msra.mxu0 0.0
    %640 = vmatprep.subr.mxu0 0.0
    %641 = vmatpush1.msra.mxu0 0.0
    %642 = vmatprep.subr.mxu0 0.0
    %643 = vmatpush1.msra.mxu0 0.0
    %644 = vmatprep.subr.mxu0 0.0
    %645 = vmatpush1.msra.mxu0 0.0
    %646 = vmatprep.subr.mxu0 0.0
    %647 = vmatpush1.msra.mxu0 0.0
    %648 = vmatprep.subr.mxu0 0.0
    %649 = vmatpush1.msra.mxu0 0.0
    %650 = vmatprep.subr.mxu0 0.0
    %651 = vmatpush1.msra.mxu0 0.0
    %652 = vmatprep.subr.mxu0 0.0
    %653 = vmatpush1.msra.mxu0 0.0
    %654 = vmatprep.subr.mxu0 0.0
    %655 = vmatpush1.msra.mxu0 0.0
    %656 = vmatprep.subr.mxu0 0.0
    %657 = vmatpush1.msra.mxu0 0.0
    %658 = vmatprep.subr.mxu0 0.0
    %659 = vmatpush1.msra.mxu0 0.0
    %660 = vmatprep.subr.mxu0 0.0
    %661 = vmatpush1.msra.mxu0 0.0
    %662 = vmatprep.subr.mxu0 0.0
    %663 = vmatpush1.msra.mxu0 0.0
    %664 = vmatprep.subr.mxu0 0.0
    %665 = vmatpush1.msra.mxu0 0.0
    %666 = vmatprep.subr.mxu0 0.0
    %667 = vmatpush1.msra.mxu0 0.0
    %668 = vmatprep.subr.mxu0 0.0
    %669 = vmatpush1.msra.mxu0 0.0
    %670 = vmatprep.subr.mxu0 0.0
    %671 = vmatpush1.msra.mxu0 0.0
    %672 = vmatprep.subr.mxu0 0.0
    %673 = vmatpush1.msra.mxu0 0.0
    %674 = vmatprep.subr.mxu0 0.0
    %675 = vmatpush1.msra.mxu0 0.0
    %676 = vmatprep.subr.mxu0 0.0
    %677 = vmatpush1.msra.mxu0 0.0
    %678 = vmatprep.subr.mxu0 0.0
    %679 = vmatpush1.msra.mxu0 0.0
    %680 = vmatprep.subr.mxu0 0.0
    %681 = vmatpush1.msra.mxu0 0.0
    %682 = vmatprep.subr.mxu0 0.0
    %683 = vmatpush1.msra.mxu0 0.0
    %684 = vmatprep.subr.mxu0 0.0
    %685 = vmatpush1.msra.mxu0 0.0
    %686 = vmatprep.subr.mxu0 0.0
    %687 = vmatpush1.msra.mxu0 0.0
    %688 = vmatprep.subr.mxu0 0.0
    %689 = vmatpush1.msra.mxu0 0.0
    %690 = vmatprep.subr.mxu0 0.0
    %691 = vmatpush1.msra.mxu0 0.0
    %692 = vmatprep.mubr.f32.mxu0 0.0
    %693 = vmatmul.mubr.f32.gmra.mrb[0].mxu0 %v626
    %v694 = vpop.f32.mrb[0].mxu0
    %v695 = vadd.f32 0.0, %v694
    %v696 = vpop.f32.mrb[0].mxu0
    %697 = vdwg.mxu0
    %698 = vmatprep.subr.mxu0 0.0
    %699 = vmatpush1.msra.mxu0 %v71
    %700 = vmatprep.subr.mxu0 0.0
    %701 = vmatpush1.msra.mxu0 %v72
    %702 = vmatprep.subr.mxu0 0.0
    %703 = vmatpush1.msra.mxu0 %v73
    %704 = vmatprep.subr.mxu0 0.0
    %705 = vmatpush1.msra.mxu0 %v74
    %706 = vmatprep.subr.mxu0 0.0
    %707 = vmatpush1.msra.mxu0 0.0
    %708 = vmatprep.subr.mxu0 0.0
    %709 = vmatpush1.msra.mxu0 0.0
    %710 = vmatprep.subr.mxu0 0.0
    %711 = vmatpush1.msra.mxu0 0.0
    %712 = vmatprep.subr.mxu0 0.0
    %713 = vmatpush1.msra.mxu0 0.0
    %714 = vmatprep.subr.mxu0 0.0
    %715 = vmatpush1.msra.mxu0 0.0
    %716 = vmatprep.subr.mxu0 0.0
    %717 = vmatpush1.msra.mxu0 0.0
    %718 = vmatprep.subr.mxu0 0.0
    %719 = vmatpush1.msra.mxu0 0.0
    %720 = vmatprep.subr.mxu0 0.0
    %721 = vmatpush1.msra.mxu0 0.0
    %722 = vmatprep.subr.mxu0 0.0
    %723 = vmatpush1.msra.mxu0 0.0
    %724 = vmatprep.subr.mxu0 0.0
    %725 = vmatpush1.msra.mxu0 0.0
    %726 = vmatprep.subr.mxu0 0.0
    %727 = vmatpush1.msra.mxu0 0.0
    %728 = vmatprep.subr.mxu0 0.0
    %729 = vmatpush1.msra.mxu0 0.0
    %730 = vmatprep.subr.mxu0 0.0
    %731 = vmatpush1.msra.mxu0 0.0
    %732 = vmatprep.subr.mxu0 0.0
    %733 = vmatpush1.msra.mxu0 0.0
    %734 = vmatprep.subr.mxu0 0.0
    %735 = vmatpush1.msra.mxu0 0.0
    %736 = vmatprep.subr.mxu0 0.0
    %737 = vmatpush1.msra.mxu0 0.0
    %738 = vmatprep.subr.mxu0 0.0
    %739 = vmatpush1.msra.mxu0 0.0
    %740 = vmatprep.subr.mxu0 0.0
    %741 = vmatpush1.msra.mxu0 0.0
    %742 = vmatprep.subr.mxu0 0.0
    %743 = vmatpush1.msra.mxu0 0.0
    %744 = vmatprep.subr.mxu0 0.0
    %745 = vmatpush1.msra.mxu0 0.0
    %746 = vmatprep.subr.mxu0 0.0
    %747 = vmatpush1.msra.mxu0 0.0
    %748 = vmatprep.subr.mxu0 0.0
    %749 = vmatpush1.msra.mxu0 0.0
    %750 = vmatprep.subr.mxu0 0.0
    %751 = vmatpush1.msra.mxu0 0.0
    %752 = vmatprep.subr.mxu0 0.0
    %753 = vmatpush1.msra.mxu0 0.0
    %754 = vmatprep.subr.mxu0 0.0
    %755 = vmatpush1.msra.mxu0 0.0
    %756 = vmatprep.subr.mxu0 0.0
    %757 = vmatpush1.msra.mxu0 0.0
    %758 = vmatprep.subr.mxu0 0.0
    %759 = vmatpush1.msra.mxu0 0.0
    %760 = vmatprep.subr.mxu0 0.0
    %761 = vmatpush1.msra.mxu0 0.0
    %762 = vmatprep.mubr.f32.mxu0 0.0
    %763 = vmatmul.mubr.f32.gmra.mrb[0].mxu0 %v539
    %v764 = vpop.f32.mrb[0].mxu0
    %v765 = vadd.f32 0.0, %v764
    %v766 = vpop.f32.mrb[0].mxu0
    %767 = vdwg.mxu0
    %v768 = vadd.f32 %v695, %v765
    %v769 = vadd.f32 %v768, %v75
    %v770 = vxor.u32 %v769, 2147483648
    %v771 = vmul.f32 %v770, 1.442695
    %v772 = vpow.pop %v771
    %v773 = vadd.f32 %v772, 1.0
    %v774 = vrcp.pop %v773
    %v775 = vmul.f32 1.0, %v774
    %v776 = vadd.f32 %v695, %v75
    %v777 = vadd.f32 %v765, %v245
    %779 = vrot.lane.b32.xlu0 %v777, 64
    %v780 = vpop.permute.xlu0 %779
    %v782 = vmul.f32 %v775, %v780
    %784 = vrot.lane.b32.xlu0 %v782, 64
    %v785 = vpop.permute.xlu0 %784
    %v787 = vadd.f32 %v776, %v785
    %v788 = vtanh.pop %v787
    %v789 = vsub.f32 1.0, %v775
    %791 = vrot.lane.b32.xlu0 %v788, 96
    %v792 = vpop.permute.xlu0 %791
    %v794 = vmul.f32 %v789, %v792
    %v795 = vmul.f32 %v775, %v535
    %v796 = vadd.f32 %v794, %v795
    %798 = vrot.lane.b32.xlu0 %v796, 96
    %v799 = vpop.permute.xlu0 %798
    %v800 = vsel %vm83, %v799, 0
    %802 = vmatprep.subr.mxu0 0.0
    %803 = vmatpush1.msra.mxu0 %v76
    %804 = vmatprep.subr.mxu0 0.0
    %805 = vmatpush1.msra.mxu0 %v77
    %806 = vmatprep.subr.mxu0 0.0
    %807 = vmatpush1.msra.mxu0 %v78
    %808 = vmatprep.subr.mxu0 0.0
    %809 = vmatpush1.msra.mxu0 %v79
    %810 = vmatprep.subr.mxu0 0.0
    %811 = vmatpush1.msra.mxu0 0.0
    %812 = vmatprep.subr.mxu0 0.0
    %813 = vmatpush1.msra.mxu0 0.0
    %814 = vmatprep.subr.mxu0 0.0
    %815 = vmatpush1.msra.mxu0 0.0
    %816 = vmatprep.subr.mxu0 0.0
    %817 = vmatpush1.msra.mxu0 0.0
    %818 = vmatprep.subr.mxu0 0.0
    %819 = vmatpush1.msra.mxu0 0.0
    %820 = vmatprep.subr.mxu0 0.0
    %821 = vmatpush1.msra.mxu0 0.0
    %822 = vmatprep.subr.mxu0 0.0
    %823 = vmatpush1.msra.mxu0 0.0
    %824 = vmatprep.subr.mxu0 0.0
    %825 = vmatpush1.msra.mxu0 0.0
    %826 = vmatprep.subr.mxu0 0.0
    %827 = vmatpush1.msra.mxu0 0.0
    %828 = vmatprep.subr.mxu0 0.0
    %829 = vmatpush1.msra.mxu0 0.0
    %830 = vmatprep.subr.mxu0 0.0
    %831 = vmatpush1.msra.mxu0 0.0
    %832 = vmatprep.subr.mxu0 0.0
    %833 = vmatpush1.msra.mxu0 0.0
    %834 = vmatprep.subr.mxu0 0.0
    %835 = vmatpush1.msra.mxu0 0.0
    %836 = vmatprep.subr.mxu0 0.0
    %837 = vmatpush1.msra.mxu0 0.0
    %838 = vmatprep.subr.mxu0 0.0
    %839 = vmatpush1.msra.mxu0 0.0
    %840 = vmatprep.subr.mxu0 0.0
    %841 = vmatpush1.msra.mxu0 0.0
    %842 = vmatprep.subr.mxu0 0.0
    %843 = vmatpush1.msra.mxu0 0.0
    %844 = vmatprep.subr.mxu0 0.0
    %845 = vmatpush1.msra.mxu0 0.0
    %846 = vmatprep.subr.mxu0 0.0
    %847 = vmatpush1.msra.mxu0 0.0
    %848 = vmatprep.subr.mxu0 0.0
    %849 = vmatpush1.msra.mxu0 0.0
    %850 = vmatprep.subr.mxu0 0.0
    %851 = vmatpush1.msra.mxu0 0.0
    %852 = vmatprep.subr.mxu0 0.0
    %853 = vmatpush1.msra.mxu0 0.0
    %854 = vmatprep.subr.mxu0 0.0
    %855 = vmatpush1.msra.mxu0 0.0
    %856 = vmatprep.subr.mxu0 0.0
    %857 = vmatpush1.msra.mxu0 0.0
    %858 = vmatprep.subr.mxu0 0.0
    %859 = vmatpush1.msra.mxu0 0.0
    %860 = vmatprep.subr.mxu0 0.0
    %861 = vmatpush1.msra.mxu0 0.0
    %862 = vmatprep.subr.mxu0 0.0
    %863 = vmatpush1.msra.mxu0 0.0
    %864 = vmatprep.subr.mxu0 0.0
    %865 = vmatpush1.msra.mxu0 0.0
    %866 = vmatprep.mubr.f32.mxu0 0.0
    %867 = vmatmul.mubr.f32.gmra.mrb[0].mxu0 %v800
    %v868 = vpop.f32.mrb[0].mxu0
    %v869 = vadd.f32 %v80, %v868
    %v870 = vpop.f32.mrb[0].mxu0
    %871 = vdwg.mxu0
    %v872 = vsel %vm349, %v869, -inf
    %873 = vmax.xlane.f32.xlu0 %v872
    %v874 = vpop.xlane.xlu0 %873
    %v875 = vsub.f32 %v869, %v874
    %v876 = vmul.f32 %v875, 1.442695
    %v877 = vpow.pop %v876
    %v878 = vsel %vm349, %v877, 0.0
    %879 = vadd.xlane.f32.xlu0 %v878
    %v880 = vpop.xlane.xlu0 %879
    %v881 = vlog2.pop %v880
    %v882 = vmul.f32 %v881, 0.6931472
    %v883 = vsub.f32 %v875, %v882
    %884 = vst [vmem:[#allocation8 + $0x2] sm:$0x1] %v883
    %v885 = vld [vmem:[#allocation2 + $0x3] sm:$0x1]
    %v887 = vsel %vm83, %v885, 0
    %889 = vmatprep.subr.mxu0 0.0
    %890 = vmatpush1.msra.mxu0 %v66
    %891 = vmatprep.subr.mxu0 0.0
    %892 = vmatpush1.msra.mxu0 %v67
    %893 = vmatprep.subr.mxu0 0.0
    %894 = vmatpush1.msra.mxu0 %v68
    %895 = vmatprep.subr.mxu0 0.0
    %896 = vmatpush1.msra.mxu0 %v69
    %897 = vmatprep.subr.mxu0 0.0
    %898 = vmatpush1.msra.mxu0 0.0
    %899 = vmatprep.subr.mxu0 0.0
    %900 = vmatpush1.msra.mxu0 0.0
    %901 = vmatprep.subr.mxu0 0.0
    %902 = vmatpush1.msra.mxu0 0.0
    %903 = vmatprep.subr.mxu0 0.0
    %904 = vmatpush1.msra.mxu0 0.0
    %905 = vmatprep.subr.mxu0 0.0
    %906 = vmatpush1.msra.mxu0 0.0
    %907 = vmatprep.subr.mxu0 0.0
    %908 = vmatpush1.msra.mxu0 0.0
    %909 = vmatprep.subr.mxu0 0.0
    %910 = vmatpush1.msra.mxu0 0.0
    %911 = vmatprep.subr.mxu0 0.0
    %912 = vmatpush1.msra.mxu0 0.0
    %913 = vmatprep.subr.mxu0 0.0
    %914 = vmatpush1.msra.mxu0 0.0
    %915 = vmatprep.subr.mxu0 0.0
    %916 = vmatpush1.msra.mxu0 0.0
    %917 = vmatprep.subr.mxu0 0.0
    %918 = vmatpush1.msra.mxu0 0.0
    %919 = vmatprep.subr.mxu0 0.0
    %920 = vmatpush1.msra.mxu0 0.0
    %921 = vmatprep.subr.mxu0 0.0
    %922 = vmatpush1.msra.mxu0 0.0
    %923 = vmatprep.subr.mxu0 0.0
    %924 = vmatpush1.msra.mxu0 0.0
    %925 = vmatprep.subr.mxu0 0.0
    %926 = vmatpush1.msra.mxu0 0.0
    %927 = vmatprep.subr.mxu0 0.0
    %928 = vmatpush1.msra.mxu0 0.0
    %929 = vmatprep.subr.mxu0 0.0
    %930 = vmatpush1.msra.mxu0 0.0
    %931 = vmatprep.subr.mxu0 0.0
    %932 = vmatpush1.msra.mxu0 0.0
    %933 = vmatprep.subr.mxu0 0.0
    %934 = vmatpush1.msra.mxu0 0.0
    %935 = vmatprep.subr.mxu0 0.0
    %936 = vmatpush1.msra.mxu0 0.0
    %937 = vmatprep.subr.mxu0 0.0
    %938 = vmatpush1.msra.mxu0 0.0
    %939 = vmatprep.subr.mxu0 0.0
    %940 = vmatpush1.msra.mxu0 0.0
    %941 = vmatprep.subr.mxu0 0.0
    %942 = vmatpush1.msra.mxu0 0.0
    %943 = vmatprep.subr.mxu0 0.0
    %944 = vmatpush1.msra.mxu0 0.0
    %945 = vmatprep.subr.mxu0 0.0
    %946 = vmatpush1.msra.mxu0 0.0
    %947 = vmatprep.subr.mxu0 0.0
    %948 = vmatpush1.msra.mxu0 0.0
    %949 = vmatprep.subr.mxu0 0.0
    %950 = vmatpush1.msra.mxu0 0.0
    %951 = vmatprep.subr.mxu0 0.0
    %952 = vmatpush1.msra.mxu0 0.0
    %953 = vmatprep.mubr.f32.mxu0 0.0
    %954 = vmatmul.mubr.f32.gmra.mrb[0].mxu0 %v887
    %v955 = vpop.f32.mrb[0].mxu0
    %v956 = vadd.f32 0.0, %v955
    %v957 = vpop.f32.mrb[0].mxu0
    %958 = vdwg.mxu0
    %959 = vmatprep.subr.mxu0 0.0
    %960 = vmatpush1.msra.mxu0 %v71
    %961 = vmatprep.subr.mxu0 0.0
    %962 = vmatpush1.msra.mxu0 %v72
    %963 = vmatprep.subr.mxu0 0.0
    %964 = vmatpush1.msra.mxu0 %v73
    %965 = vmatprep.subr.mxu0 0.0
    %966 = vmatpush1.msra.mxu0 %v74
    %967 = vmatprep.subr.mxu0 0.0
    %968 = vmatpush1.msra.mxu0 0.0
    %969 = vmatprep.subr.mxu0 0.0
    %970 = vmatpush1.msra.mxu0 0.0
    %971 = vmatprep.subr.mxu0 0.0
    %972 = vmatpush1.msra.mxu0 0.0
    %973 = vmatprep.subr.mxu0 0.0
    %974 = vmatpush1.msra.mxu0 0.0
    %975 = vmatprep.subr.mxu0 0.0
    %976 = vmatpush1.msra.mxu0 0.0
    %977 = vmatprep.subr.mxu0 0.0
    %978 = vmatpush1.msra.mxu0 0.0
    %979 = vmatprep.subr.mxu0 0.0
    %980 = vmatpush1.msra.mxu0 0.0
    %981 = vmatprep.subr.mxu0 0.0
    %982 = vmatpush1.msra.mxu0 0.0
    %983 = vmatprep.subr.mxu0 0.0
    %984 = vmatpush1.msra.mxu0 0.0
    %985 = vmatprep.subr.mxu0 0.0
    %986 = vmatpush1.msra.mxu0 0.0
    %987 = vmatprep.subr.mxu0 0.0
    %988 = vmatpush1.msra.mxu0 0.0
    %989 = vmatprep.subr.mxu0 0.0
    %990 = vmatpush1.msra.mxu0 0.0
    %991 = vmatprep.subr.mxu0 0.0
    %992 = vmatpush1.msra.mxu0 0.0
    %993 = vmatprep.subr.mxu0 0.0
    %994 = vmatpush1.msra.mxu0 0.0
    %995 = vmatprep.subr.mxu0 0.0
    %996 = vmatpush1.msra.mxu0 0.0
    %997 = vmatprep.subr.mxu0 0.0
    %998 = vmatpush1.msra.mxu0 0.0
    %999 = vmatprep.subr.mxu0 0.0
    %1000 = vmatpush1.msra.mxu0 0.0
    %1001 = vmatprep.subr.mxu0 0.0
    %1002 = vmatpush1.msra.mxu0 0.0
    %1003 = vmatprep.subr.mxu0 0.0
    %1004 = vmatpush1.msra.mxu0 0.0
    %1005 = vmatprep.subr.mxu0 0.0
    %1006 = vmatpush1.msra.mxu0 0.0
    %1007 = vmatprep.subr.mxu0 0.0
    %1008 = vmatpush1.msra.mxu0 0.0
    %1009 = vmatprep.subr.mxu0 0.0
    %1010 = vmatpush1.msra.mxu0 0.0
    %1011 = vmatprep.subr.mxu0 0.0
    %1012 = vmatpush1.msra.mxu0 0.0
    %1013 = vmatprep.subr.mxu0 0.0
    %1014 = vmatpush1.msra.mxu0 0.0
    %1015 = vmatprep.subr.mxu0 0.0
    %1016 = vmatpush1.msra.mxu0 0.0
    %1017 = vmatprep.subr.mxu0 0.0
    %1018 = vmatpush1.msra.mxu0 0.0
    %1019 = vmatprep.subr.mxu0 0.0
    %1020 = vmatpush1.msra.mxu0 0.0
    %1021 = vmatprep.subr.mxu0 0.0
    %1022 = vmatpush1.msra.mxu0 0.0
    %1023 = vmatprep.mubr.f32.mxu0 0.0
    %1024 = vmatmul.mubr.f32.gmra.mrb[0].mxu0 %v800
    %v1025 = vpop.f32.mrb[0].mxu0
    %v1026 = vadd.f32 0.0, %v1025
    %v1027 = vpop.f32.mrb[0].mxu0
    %1028 = vdwg.mxu0
    %v1029 = vadd.f32 %v956, %v1026
    %v1030 = vadd.f32 %v1029, %v75
    %v1031 = vxor.u32 %v1030, 2147483648
    %v1032 = vmul.f32 %v1031, 1.442695
    %v1033 = vpow.pop %v1032
    %v1034 = vadd.f32 %v1033, 1.0
    %v1035 = vrcp.pop %v1034
    %v1036 = vmul.f32 1.0, %v1035
    %v1037 = vadd.f32 %v956, %v75
    %v1038 = vadd.f32 %v1026, %v245
    %1040 = vrot.lane.b32.xlu0 %v1038, 64
    %v1041 = vpop.permute.xlu0 %1040
    %v1043 = vmul.f32 %v1036, %v1041
    %1045 = vrot.lane.b32.xlu0 %v1043, 64
    %v1046 = vpop.permute.xlu0 %1045
    %v1048 = vadd.f32 %v1037, %v1046
    %v1049 = vtanh.pop %v1048
    %v1050 = vsub.f32 1.0, %v1036
    %1052 = vrot.lane.b32.xlu0 %v1049, 96
    %v1053 = vpop.permute.xlu0 %1052
    %v1055 = vmul.f32 %v1050, %v1053
    %v1056 = vmul.f32 %v1036, %v796
    %v1057 = vadd.f32 %v1055, %v1056
    %1059 = vrot.lane.b32.xlu0 %v1057, 96
    %v1060 = vpop.permute.xlu0 %1059
    %v1061 = vsel %vm83, %v1060, 0
    %1063 = vmatprep.subr.mxu0 0.0
    %1064 = vmatpush1.msra.mxu0 %v76
    %1065 = vmatprep.subr.mxu0 0.0
    %1066 = vmatpush1.msra.mxu0 %v77
    %1067 = vmatprep.subr.mxu0 0.0
    %1068 = vmatpush1.msra.mxu0 %v78
    %1069 = vmatprep.subr.mxu0 0.0
    %1070 = vmatpush1.msra.mxu0 %v79
    %1071 = vmatprep.subr.mxu0 0.0
    %1072 = vmatpush1.msra.mxu0 0.0
    %1073 = vmatprep.subr.mxu0 0.0
    %1074 = vmatpush1.msra.mxu0 0.0
    %1075 = vmatprep.subr.mxu0 0.0
    %1076 = vmatpush1.msra.mxu0 0.0
    %1077 = vmatprep.subr.mxu0 0.0
    %1078 = vmatpush1.msra.mxu0 0.0
    %1079 = vmatprep.subr.mxu0 0.0
    %1080 = vmatpush1.msra.mxu0 0.0
    %1081 = vmatprep.subr.mxu0 0.0
    %1082 = vmatpush1.msra.mxu0 0.0
    %1083 = vmatprep.subr.mxu0 0.0
    %1084 = vmatpush1.msra.mxu0 0.0
    %1085 = vmatprep.subr.mxu0 0.0
    %1086 = vmatpush1.msra.mxu0 0.0
    %1087 = vmatprep.subr.mxu0 0.0
    %1088 = vmatpush1.msra.mxu0 0.0
    %1089 = vmatprep.subr.mxu0 0.0
    %1090 = vmatpush1.msra.mxu0 0.0
    %1091 = vmatprep.subr.mxu0 0.0
    %1092 = vmatpush1.msra.mxu0 0.0
    %1093 = vmatprep.subr.mxu0 0.0
    %1094 = vmatpush1.msra.mxu0 0.0
    %1095 = vmatprep.subr.mxu0 0.0
    %1096 = vmatpush1.msra.mxu0 0.0
    %1097 = vmatprep.subr.mxu0 0.0
    %1098 = vmatpush1.msra.mxu0 0.0
    %1099 = vmatprep.subr.mxu0 0.0
    %1100 = vmatpush1.msra.mxu0 0.0
    %1101 = vmatprep.subr.mxu0 0.0
    %1102 = vmatpush1.msra.mxu0 0.0
    %1103 = vmatprep.subr.mxu0 0.0
    %1104 = vmatpush1.msra.mxu0 0.0
    %1105 = vmatprep.subr.mxu0 0.0
    %1106 = vmatpush1.msra.mxu0 0.0
    %1107 = vmatprep.subr.mxu0 0.0
    %1108 = vmatpush1.msra.mxu0 0.0
    %1109 = vmatprep.subr.mxu0 0.0
    %1110 = vmatpush1.msra.mxu0 0.0
    %1111 = vmatprep.subr.mxu0 0.0
    %1112 = vmatpush1.msra.mxu0 0.0
    %1113 = vmatprep.subr.mxu0 0.0
    %1114 = vmatpush1.msra.mxu0 0.0
    %1115 = vmatprep.subr.mxu0 0.0
    %1116 = vmatpush1.msra.mxu0 0.0
    %1117 = vmatprep.subr.mxu0 0.0
    %1118 = vmatpush1.msra.mxu0 0.0
    %1119 = vmatprep.subr.mxu0 0.0
    %1120 = vmatpush1.msra.mxu0 0.0
    %1121 = vmatprep.subr.mxu0 0.0
    %1122 = vmatpush1.msra.mxu0 0.0
    %1123 = vmatprep.subr.mxu0 0.0
    %1124 = vmatpush1.msra.mxu0 0.0
    %1125 = vmatprep.subr.mxu0 0.0
    %1126 = vmatpush1.msra.mxu0 0.0
    %1127 = vmatprep.mubr.f32.mxu0 0.0
    %1128 = vmatmul.mubr.f32.gmra.mrb[0].mxu0 %v1061
    %v1129 = vpop.f32.mrb[0].mxu0
    %v1130 = vadd.f32 %v80, %v1129
    %v1131 = vpop.f32.mrb[0].mxu0
    %1132 = vdwg.mxu0
    %v1133 = vsel %vm349, %v1130, -inf
    %1134 = vmax.xlane.f32.xlu0 %v1133
    %v1135 = vpop.xlane.xlu0 %1134
    %v1136 = vsub.f32 %v1130, %v1135
    %v1137 = vmul.f32 %v1136, 1.442695
    %v1138 = vpow.pop %v1137
    %v1139 = vsel %vm349, %v1138, 0.0
    %1140 = vadd.xlane.f32.xlu0 %v1139
    %v1141 = vpop.xlane.xlu0 %1140
    %v1142 = vlog2.pop %v1141
    %v1143 = vmul.f32 %v1142, 0.6931472
    %v1144 = vsub.f32 %v1136, %v1143
    %1145 = vst [vmem:[#allocation8 + $0x3] sm:$0x1] %v1144
    %v1146 = vld [vmem:[#allocation2 + $0x4] sm:$0x1]
    %v1148 = vsel %vm83, %v1146, 0
    %1150 = vmatprep.subr.mxu0 0.0
    %1151 = vmatpush1.msra.mxu0 %v66
    %1152 = vmatprep.subr.mxu0 0.0
    %1153 = vmatpush1.msra.mxu0 %v67
    %1154 = vmatprep.subr.mxu0 0.0
    %1155 = vmatpush1.msra.mxu0 %v68
    %1156 = vmatprep.subr.mxu0 0.0
    %1157 = vmatpush1.msra.mxu0 %v69
    %1158 = vmatprep.subr.mxu0 0.0
    %1159 = vmatpush1.msra.mxu0 0.0
    %1160 = vmatprep.subr.mxu0 0.0
    %1161 = vmatpush1.msra.mxu0 0.0
    %1162 = vmatprep.subr.mxu0 0.0
    %1163 = vmatpush1.msra.mxu0 0.0
    %1164 = vmatprep.subr.mxu0 0.0
    %1165 = vmatpush1.msra.mxu0 0.0
    %1166 = vmatprep.subr.mxu0 0.0
    %1167 = vmatpush1.msra.mxu0 0.0
    %1168 = vmatprep.subr.mxu0 0.0
    %1169 = vmatpush1.msra.mxu0 0.0
    %1170 = vmatprep.subr.mxu0 0.0
    %1171 = vmatpush1.msra.mxu0 0.0
    %1172 = vmatprep.subr.mxu0 0.0
    %1173 = vmatpush1.msra.mxu0 0.0
    %1174 = vmatprep.subr.mxu0 0.0
    %1175 = vmatpush1.msra.mxu0 0.0
    %1176 = vmatprep.subr.mxu0 0.0
    %1177 = vmatpush1.msra.mxu0 0.0
    %1178 = vmatprep.subr.mxu0 0.0
    %1179 = vmatpush1.msra.mxu0 0.0
    %1180 = vmatprep.subr.mxu0 0.0
    %1181 = vmatpush1.msra.mxu0 0.0
    %1182 = vmatprep.subr.mxu0 0.0
    %1183 = vmatpush1.msra.mxu0 0.0
    %1184 = vmatprep.subr.mxu0 0.0
    %1185 = vmatpush1.msra.mxu0 0.0
    %1186 = vmatprep.subr.mxu0 0.0
    %1187 = vmatpush1.msra.mxu0 0.0
    %1188 = vmatprep.subr.mxu0 0.0
    %1189 = vmatpush1.msra.mxu0 0.0
    %1190 = vmatprep.subr.mxu0 0.0
    %1191 = vmatpush1.msra.mxu0 0.0
    %1192 = vmatprep.subr.mxu0 0.0
    %1193 = vmatpush1.msra.mxu0 0.0
    %1194 = vmatprep.subr.mxu0 0.0
    %1195 = vmatpush1.msra.mxu0 0.0
    %1196 = vmatprep.subr.mxu0 0.0
    %1197 = vmatpush1.msra.mxu0 0.0
    %1198 = vmatprep.subr.mxu0 0.0
    %1199 = vmatpush1.msra.mxu0 0.0
    %1200 = vmatprep.subr.mxu0 0.0
    %1201 = vmatpush1.msra.mxu0 0.0
    %1202 = vmatprep.subr.mxu0 0.0
    %1203 = vmatpush1.msra.mxu0 0.0
    %1204 = vmatprep.subr.mxu0 0.0
    %1205 = vmatpush1.msra.mxu0 0.0
    %1206 = vmatprep.subr.mxu0 0.0
    %1207 = vmatpush1.msra.mxu0 0.0
    %1208 = vmatprep.subr.mxu0 0.0
    %1209 = vmatpush1.msra.mxu0 0.0
    %1210 = vmatprep.subr.mxu0 0.0
    %1211 = vmatpush1.msra.mxu0 0.0
    %1212 = vmatprep.subr.mxu0 0.0
    %1213 = vmatpush1.msra.mxu0 0.0
    %1214 = vmatprep.mubr.f32.mxu0 0.0
    %1215 = vmatmul.mubr.f32.gmra.mrb[0].mxu0 %v1148
    %v1216 = vpop.f32.mrb[0].mxu0
    %v1217 = vadd.f32 0.0, %v1216
    %v1218 = vpop.f32.mrb[0].mxu0
    %1219 = vdwg.mxu0
    %1220 = vmatprep.subr.mxu0 0.0
    %1221 = vmatpush1.msra.mxu0 %v71
    %1222 = vmatprep.subr.mxu0 0.0
    %1223 = vmatpush1.msra.mxu0 %v72
    %1224 = vmatprep.subr.mxu0 0.0
    %1225 = vmatpush1.msra.mxu0 %v73
    %1226 = vmatprep.subr.mxu0 0.0
    %1227 = vmatpush1.msra.mxu0 %v74
    %1228 = vmatprep.subr.mxu0 0.0
    %1229 = vmatpush1.msra.mxu0 0.0
    %1230 = vmatprep.subr.mxu0 0.0
    %1231 = vmatpush1.msra.mxu0 0.0
    %1232 = vmatprep.subr.mxu0 0.0
    %1233 = vmatpush1.msra.mxu0 0.0
    %1234 = vmatprep.subr.mxu0 0.0
    %1235 = vmatpush1.msra.mxu0 0.0
    %1236 = vmatprep.subr.mxu0 0.0
    %1237 = vmatpush1.msra.mxu0 0.0
    %1238 = vmatprep.subr.mxu0 0.0
    %1239 = vmatpush1.msra.mxu0 0.0
    %1240 = vmatprep.subr.mxu0 0.0
    %1241 = vmatpush1.msra.mxu0 0.0
    %1242 = vmatprep.subr.mxu0 0.0
    %1243 = vmatpush1.msra.mxu0 0.0
    %1244 = vmatprep.subr.mxu0 0.0
    %1245 = vmatpush1.msra.mxu0 0.0
    %1246 = vmatprep.subr.mxu0 0.0
    %1247 = vmatpush1.msra.mxu0 0.0
    %1248 = vmatprep.subr.mxu0 0.0
    %1249 = vmatpush1.msra.mxu0 0.0
    %1250 = vmatprep.subr.mxu0 0.0
    %1251 = vmatpush1.msra.mxu0 0.0
    %1252 = vmatprep.subr.mxu0 0.0
    %1253 = vmatpush1.msra.mxu0 0.0
    %1254 = vmatprep.subr.mxu0 0.0
    %1255 = vmatpush1.msra.mxu0 0.0
    %1256 = vmatprep.subr.mxu0 0.0
    %1257 = vmatpush1.msra.mxu0 0.0
    %1258 = vmatprep.subr.mxu0 0.0
    %1259 = vmatpush1.msra.mxu0 0.0
    %1260 = vmatprep.subr.mxu0 0.0
    %1261 = vmatpush1.msra.mxu0 0.0
    %1262 = vmatprep.subr.mxu0 0.0
    %1263 = vmatpush1.msra.mxu0 0.0
    %1264 = vmatprep.subr.mxu0 0.0
    %1265 = vmatpush1.msra.mxu0 0.0
    %1266 = vmatprep.subr.mxu0 0.0
    %1267 = vmatpush1.msra.mxu0 0.0
    %1268 = vmatprep.subr.mxu0 0.0
    %1269 = vmatpush1.msra.mxu0 0.0
    %1270 = vmatprep.subr.mxu0 0.0
    %1271 = vmatpush1.msra.mxu0 0.0
    %1272 = vmatprep.subr.mxu0 0.0
    %1273 = vmatpush1.msra.mxu0 0.0
    %1274 = vmatprep.subr.mxu0 0.0
    %1275 = vmatpush1.msra.mxu0 0.0
    %1276 = vmatprep.subr.mxu0 0.0
    %1277 = vmatpush1.msra.mxu0 0.0
    %1278 = vmatprep.subr.mxu0 0.0
    %1279 = vmatpush1.msra.mxu0 0.0
    %1280 = vmatprep.subr.mxu0 0.0
    %1281 = vmatpush1.msra.mxu0 0.0
    %1282 = vmatprep.subr.mxu0 0.0
    %1283 = vmatpush1.msra.mxu0 0.0
    %1284 = vmatprep.mubr.f32.mxu0 0.0
    %1285 = vmatmul.mubr.f32.gmra.mrb[0].mxu0 %v1061
    %v1286 = vpop.f32.mrb[0].mxu0
    %v1287 = vadd.f32 0.0, %v1286
    %v1288 = vpop.f32.mrb[0].mxu0
    %1289 = vdwg.mxu0
    %v1290 = vadd.f32 %v1217, %v1287
    %v1291 = vadd.f32 %v1290, %v75
    %v1292 = vxor.u32 %v1291, 2147483648
    %v1293 = vmul.f32 %v1292, 1.442695
    %v1294 = vpow.pop %v1293
    %v1295 = vadd.f32 %v1294, 1.0
    %v1296 = vrcp.pop %v1295
    %v1297 = vmul.f32 1.0, %v1296
    %v1298 = vadd.f32 %v1217, %v75
    %v1299 = vadd.f32 %v1287, %v245
    %1301 = vrot.lane.b32.xlu0 %v1299, 64
    %v1302 = vpop.permute.xlu0 %1301
    %v1304 = vmul.f32 %v1297, %v1302
    %1306 = vrot.lane.b32.xlu0 %v1304, 64
    %v1307 = vpop.permute.xlu0 %1306
    %v1309 = vadd.f32 %v1298, %v1307
    %v1310 = vtanh.pop %v1309
    %v1311 = vsub.f32 1.0, %v1297
    %1313 = vrot.lane.b32.xlu0 %v1310, 96
    %v1314 = vpop.permute.xlu0 %1313
    %v1316 = vmul.f32 %v1311, %v1314
    %v1317 = vmul.f32 %v1297, %v1057
    %v1318 = vadd.f32 %v1316, %v1317
    %1320 = vrot.lane.b32.xlu0 %v1318, 96
    %v1321 = vpop.permute.xlu0 %1320
    %v1322 = vsel %vm83, %v1321, 0
    %1324 = vmatprep.subr.mxu0 0.0
    %1325 = vmatpush1.msra.mxu0 %v76
    %1326 = vmatprep.subr.mxu0 0.0
    %1327 = vmatpush1.msra.mxu0 %v77
    %1328 = vmatprep.subr.mxu0 0.0
    %1329 = vmatpush1.msra.mxu0 %v78
    %1330 = vmatprep.subr.mxu0 0.0
    %1331 = vmatpush1.msra.mxu0 %v79
    %1332 = vmatprep.subr.mxu0 0.0
    %1333 = vmatpush1.msra.mxu0 0.0
    %1334 = vmatprep.subr.mxu0 0.0
    %1335 = vmatpush1.msra.mxu0 0.0
    %1336 = vmatprep.subr.mxu0 0.0
    %1337 = vmatpush1.msra.mxu0 0.0
    %1338 = vmatprep.subr.mxu0 0.0
    %1339 = vmatpush1.msra.mxu0 0.0
    %1340 = vmatprep.subr.mxu0 0.0
    %1341 = vmatpush1.msra.mxu0 0.0
    %1342 = vmatprep.subr.mxu0 0.0
    %1343 = vmatpush1.msra.mxu0 0.0
    %1344 = vmatprep.subr.mxu0 0.0
    %1345 = vmatpush1.msra.mxu0 0.0
    %1346 = vmatprep.subr.mxu0 0.0
    %1347 = vmatpush1.msra.mxu0 0.0
    %1348 = vmatprep.subr.mxu0 0.0
    %1349 = vmatpush1.msra.mxu0 0.0
    %1350 = vmatprep.subr.mxu0 0.0
    %1351 = vmatpush1.msra.mxu0 0.0
    %1352 = vmatprep.subr.mxu0 0.0
    %1353 = vmatpush1.msra.mxu0 0.0
    %1354 = vmatprep.subr.mxu0 0.0
    %1355 = vmatpush1.msra.mxu0 0.0
    %1356 = vmatprep.subr.mxu0 0.0
    %1357 = vmatpush1.msra.mxu0 0.0
    %1358 = vmatprep.subr.mxu0 0.0
    %1359 = vmatpush1.msra.mxu0 0.0
    %1360 = vmatprep.subr.mxu0 0.0
    %1361 = vmatpush1.msra.mxu0 0.0
    %1362 = vmatprep.subr.mxu0 0.0
    %1363 = vmatpush1.msra.mxu0 0.0
    %1364 = vmatprep.subr.mxu0 0.0
    %1365 = vmatpush1.msra.mxu0 0.0
    %1366 = vmatprep.subr.mxu0 0.0
    %1367 = vmatpush1.msra.mxu0 0.0
    %1368 = vmatprep.subr.mxu0 0.0
    %1369 = vmatpush1.msra.mxu0 0.0
    %1370 = vmatprep.subr.mxu0 0.0
    %1371 = vmatpush1.msra.mxu0 0.0
    %1372 = vmatprep.subr.mxu0 0.0
    %1373 = vmatpush1.msra.mxu0 0.0
    %1374 = vmatprep.subr.mxu0 0.0
    %1375 = vmatpush1.msra.mxu0 0.0
    %1376 = vmatprep.subr.mxu0 0.0
    %1377 = vmatpush1.msra.mxu0 0.0
    %1378 = vmatprep.subr.mxu0 0.0
    %1379 = vmatpush1.msra.mxu0 0.0
    %1380 = vmatprep.subr.mxu0 0.0
    %1381 = vmatpush1.msra.mxu0 0.0
    %1382 = vmatprep.subr.mxu0 0.0
    %1383 = vmatpush1.msra.mxu0 0.0
    %1384 = vmatprep.subr.mxu0 0.0
    %1385 = vmatpush1.msra.mxu0 0.0
    %1386 = vmatprep.subr.mxu0 0.0
    %1387 = vmatpush1.msra.mxu0 0.0
    %1388 = vmatprep.mubr.f32.mxu0 0.0
    %1389 = vmatmul.mubr.f32.gmra.mrb[0].mxu0 %v1322
    %v1390 = vpop.f32.mrb[0].mxu0
    %v1391 = vadd.f32 %v80, %v1390
    %v1392 = vpop.f32.mrb[0].mxu0
    %1393 = vdwg.mxu0
    %v1394 = vsel %vm349, %v1391, -inf
    %1395 = vmax.xlane.f32.xlu0 %v1394
    %v1396 = vpop.xlane.xlu0 %1395
    %v1397 = vsub.f32 %v1391, %v1396
    %v1398 = vmul.f32 %v1397, 1.442695
    %v1399 = vpow.pop %v1398
    %v1400 = vsel %vm349, %v1399, 0.0
    %1401 = vadd.xlane.f32.xlu0 %v1400
    %v1402 = vpop.xlane.xlu0 %1401
    %v1403 = vlog2.pop %v1402
    %v1404 = vmul.f32 %v1403, 0.6931472
    %v1405 = vsub.f32 %v1397, %v1404
    %1406 = vst [vmem:[#allocation8 + $0x4] sm:$0x1] %v1405
    %v1407 = vld [vmem:[#allocation2 + $0x5] sm:$0x1]
    %v1409 = vsel %vm83, %v1407, 0
    %1411 = vmatprep.subr.mxu0 0.0
    %1412 = vmatpush1.msra.mxu0 %v66
    %1413 = vmatprep.subr.mxu0 0.0
    %1414 = vmatpush1.msra.mxu0 %v67
    %1415 = vmatprep.subr.mxu0 0.0
    %1416 = vmatpush1.msra.mxu0 %v68
    %1417 = vmatprep.subr.mxu0 0.0
    %1418 = vmatpush1.msra.mxu0 %v69
    %1419 = vmatprep.subr.mxu0 0.0
    %1420 = vmatpush1.msra.mxu0 0.0
    %1421 = vmatprep.subr.mxu0 0.0
    %1422 = vmatpush1.msra.mxu0 0.0
    %1423 = vmatprep.subr.mxu0 0.0
    %1424 = vmatpush1.msra.mxu0 0.0
    %1425 = vmatprep.subr.mxu0 0.0
    %1426 = vmatpush1.msra.mxu0 0.0
    %1427 = vmatprep.subr.mxu0 0.0
    %1428 = vmatpush1.msra.mxu0 0.0
    %1429 = vmatprep.subr.mxu0 0.0
    %1430 = vmatpush1.msra.mxu0 0.0
    %1431 = vmatprep.subr.mxu0 0.0
    %1432 = vmatpush1.msra.mxu0 0.0
    %1433 = vmatprep.subr.mxu0 0.0
    %1434 = vmatpush1.msra.mxu0 0.0
    %1435 = vmatprep.subr.mxu0 0.0
    %1436 = vmatpush1.msra.mxu0 0.0
    %1437 = vmatprep.subr.mxu0 0.0
    %1438 = vmatpush1.msra.mxu0 0.0
    %1439 = vmatprep.subr.mxu0 0.0
    %1440 = vmatpush1.msra.mxu0 0.0
    %1441 = vmatprep.subr.mxu0 0.0
    %1442 = vmatpush1.msra.mxu0 0.0
    %1443 = vmatprep.subr.mxu0 0.0
    %1444 = vmatpush1.msra.mxu0 0.0
    %1445 = vmatprep.subr.mxu0 0.0
    %1446 = vmatpush1.msra.mxu0 0.0
    %1447 = vmatprep.subr.mxu0 0.0
    %1448 = vmatpush1.msra.mxu0 0.0
    %1449 = vmatprep.subr.mxu0 0.0
    %1450 = vmatpush1.msra.mxu0 0.0
    %1451 = vmatprep.subr.mxu0 0.0
    %1452 = vmatpush1.msra.mxu0 0.0
    %1453 = vmatprep.subr.mxu0 0.0
    %1454 = vmatpush1.msra.mxu0 0.0
    %1455 = vmatprep.subr.mxu0 0.0
    %1456 = vmatpush1.msra.mxu0 0.0
    %1457 = vmatprep.subr.mxu0 0.0
    %1458 = vmatpush1.msra.mxu0 0.0
    %1459 = vmatprep.subr.mxu0 0.0
    %1460 = vmatpush1.msra.mxu0 0.0
    %1461 = vmatprep.subr.mxu0 0.0
    %1462 = vmatpush1.msra.mxu0 0.0
    %1463 = vmatprep.subr.mxu0 0.0
    %1464 = vmatpush1.msra.mxu0 0.0
    %1465 = vmatprep.subr.mxu0 0.0
    %1466 = vmatpush1.msra.mxu0 0.0
    %1467 = vmatprep.subr.mxu0 0.0
    %1468 = vmatpush1.msra.mxu0 0.0
    %1469 = vmatprep.subr.mxu0 0.0
    %1470 = vmatpush1.msra.mxu0 0.0
    %1471 = vmatprep.subr.mxu0 0.0
    %1472 = vmatpush1.msra.mxu0 0.0
    %1473 = vmatprep.subr.mxu0 0.0
    %1474 = vmatpush1.msra.mxu0 0.0
    %1475 = vmatprep.mubr.f32.mxu0 0.0
    %1476 = vmatmul.mubr.f32.gmra.mrb[0].mxu0 %v1409
    %v1477 = vpop.f32.mrb[0].mxu0
    %v1478 = vadd.f32 0.0, %v1477
    %v1479 = vpop.f32.mrb[0].mxu0
    %1480 = vdwg.mxu0
    %1481 = vmatprep.subr.mxu0 0.0
    %1482 = vmatpush1.msra.mxu0 %v71
    %1483 = vmatprep.subr.mxu0 0.0
    %1484 = vmatpush1.msra.mxu0 %v72
    %1485 = vmatprep.subr.mxu0 0.0
    %1486 = vmatpush1.msra.mxu0 %v73
    %1487 = vmatprep.subr.mxu0 0.0
    %1488 = vmatpush1.msra.mxu0 %v74
    %1489 = vmatprep.subr.mxu0 0.0
    %1490 = vmatpush1.msra.mxu0 0.0
    %1491 = vmatprep.subr.mxu0 0.0
    %1492 = vmatpush1.msra.mxu0 0.0
    %1493 = vmatprep.subr.mxu0 0.0
    %1494 = vmatpush1.msra.mxu0 0.0
    %1495 = vmatprep.subr.mxu0 0.0
    %1496 = vmatpush1.msra.mxu0 0.0
    %1497 = vmatprep.subr.mxu0 0.0
    %1498 = vmatpush1.msra.mxu0 0.0
    %1499 = vmatprep.subr.mxu0 0.0
    %1500 = vmatpush1.msra.mxu0 0.0
    %1501 = vmatprep.subr.mxu0 0.0
    %1502 = vmatpush1.msra.mxu0 0.0
    %1503 = vmatprep.subr.mxu0 0.0
    %1504 = vmatpush1.msra.mxu0 0.0
    %1505 = vmatprep.subr.mxu0 0.0
    %1506 = vmatpush1.msra.mxu0 0.0
    %1507 = vmatprep.subr.mxu0 0.0
    %1508 = vmatpush1.msra.mxu0 0.0
    %1509 = vmatprep.subr.mxu0 0.0
    %1510 = vmatpush1.msra.mxu0 0.0
    %1511 = vmatprep.subr.mxu0 0.0
    %1512 = vmatpush1.msra.mxu0 0.0
    %1513 = vmatprep.subr.mxu0 0.0
    %1514 = vmatpush1.msra.mxu0 0.0
    %1515 = vmatprep.subr.mxu0 0.0
    %1516 = vmatpush1.msra.mxu0 0.0
    %1517 = vmatprep.subr.mxu0 0.0
    %1518 = vmatpush1.msra.mxu0 0.0
    %1519 = vmatprep.subr.mxu0 0.0
    %1520 = vmatpush1.msra.mxu0 0.0
    %1521 = vmatprep.subr.mxu0 0.0
    %1522 = vmatpush1.msra.mxu0 0.0
    %1523 = vmatprep.subr.mxu0 0.0
    %1524 = vmatpush1.msra.mxu0 0.0
    %1525 = vmatprep.subr.mxu0 0.0
    %1526 = vmatpush1.msra.mxu0 0.0
    %1527 = vmatprep.subr.mxu0 0.0
    %1528 = vmatpush1.msra.mxu0 0.0
    %1529 = vmatprep.subr.mxu0 0.0
    %1530 = vmatpush1.msra.mxu0 0.0
    %1531 = vmatprep.subr.mxu0 0.0
    %1532 = vmatpush1.msra.mxu0 0.0
    %1533 = vmatprep.subr.mxu0 0.0
    %1534 = vmatpush1.msra.mxu0 0.0
    %1535 = vmatprep.subr.mxu0 0.0
    %1536 = vmatpush1.msra.mxu0 0.0
    %1537 = vmatprep.subr.mxu0 0.0
    %1538 = vmatpush1.msra.mxu0 0.0
    %1539 = vmatprep.subr.mxu0 0.0
    %1540 = vmatpush1.msra.mxu0 0.0
    %1541 = vmatprep.subr.mxu0 0.0
    %1542 = vmatpush1.msra.mxu0 0.0
    %1543 = vmatprep.subr.mxu0 0.0
    %1544 = vmatpush1.msra.mxu0 0.0
    %1545 = vmatprep.mubr.f32.mxu0 0.0
    %1546 = vmatmul.mubr.f32.gmra.mrb[0].mxu0 %v1322
    %v1547 = vpop.f32.mrb[0].mxu0
    %v1548 = vadd.f32 0.0, %v1547
    %v1549 = vpop.f32.mrb[0].mxu0
    %1550 = vdwg.mxu0
    %v1551 = vadd.f32 %v1478, %v1548
    %v1552 = vadd.f32 %v1551, %v75
    %v1553 = vxor.u32 %v1552, 2147483648
    %v1554 = vmul.f32 %v1553, 1.442695
    %v1555 = vpow.pop %v1554
    %v1556 = vadd.f32 %v1555, 1.0
    %v1557 = vrcp.pop %v1556
    %v1558 = vmul.f32 1.0, %v1557
    %v1559 = vadd.f32 %v1478, %v75
    %v1560 = vadd.f32 %v1548, %v245
    %1562 = vrot.lane.b32.xlu0 %v1560, 64
    %v1563 = vpop.permute.xlu0 %1562
    %v1565 = vmul.f32 %v1558, %v1563
    %1567 = vrot.lane.b32.xlu0 %v1565, 64
    %v1568 = vpop.permute.xlu0 %1567
    %v1570 = vadd.f32 %v1559, %v1568
    %v1571 = vtanh.pop %v1570
    %v1572 = vsub.f32 1.0, %v1558
    %1574 = vrot.lane.b32.xlu0 %v1571, 96
    %v1575 = vpop.permute.xlu0 %1574
    %v1577 = vmul.f32 %v1572, %v1575
    %v1578 = vmul.f32 %v1558, %v1318
    %v1579 = vadd.f32 %v1577, %v1578
    %1581 = vrot.lane.b32.xlu0 %v1579, 96
    %v1582 = vpop.permute.xlu0 %1581
    %v1583 = vsel %vm83, %v1582, 0
    %1585 = vmatprep.subr.mxu0 0.0
    %1586 = vmatpush1.msra.mxu0 %v76
    %1587 = vmatprep.subr.mxu0 0.0
    %1588 = vmatpush1.msra.mxu0 %v77
    %1589 = vmatprep.subr.mxu0 0.0
    %1590 = vmatpush1.msra.mxu0 %v78
    %1591 = vmatprep.subr.mxu0 0.0
    %1592 = vmatpush1.msra.mxu0 %v79
    %1593 = vmatprep.subr.mxu0 0.0
    %1594 = vmatpush1.msra.mxu0 0.0
    %1595 = vmatprep.subr.mxu0 0.0
    %1596 = vmatpush1.msra.mxu0 0.0
    %1597 = vmatprep.subr.mxu0 0.0
    %1598 = vmatpush1.msra.mxu0 0.0
    %1599 = vmatprep.subr.mxu0 0.0
    %1600 = vmatpush1.msra.mxu0 0.0
    %1601 = vmatprep.subr.mxu0 0.0
    %1602 = vmatpush1.msra.mxu0 0.0
    %1603 = vmatprep.subr.mxu0 0.0
    %1604 = vmatpush1.msra.mxu0 0.0
    %1605 = vmatprep.subr.mxu0 0.0
    %1606 = vmatpush1.msra.mxu0 0.0
    %1607 = vmatprep.subr.mxu0 0.0
    %1608 = vmatpush1.msra.mxu0 0.0
    %1609 = vmatprep.subr.mxu0 0.0
    %1610 = vmatpush1.msra.mxu0 0.0
    %1611 = vmatprep.subr.mxu0 0.0
    %1612 = vmatpush1.msra.mxu0 0.0
    %1613 = vmatprep.subr.mxu0 0.0
    %1614 = vmatpush1.msra.mxu0 0.0
    %1615 = vmatprep.subr.mxu0 0.0
    %1616 = vmatpush1.msra.mxu0 0.0
    %1617 = vmatprep.subr.mxu0 0.0
    %1618 = vmatpush1.msra.mxu0 0.0
    %1619 = vmatprep.subr.mxu0 0.0
    %1620 = vmatpush1.msra.mxu0 0.0
    %1621 = vmatprep.subr.mxu0 0.0
    %1622 = vmatpush1.msra.mxu0 0.0
    %1623 = vmatprep.subr.mxu0 0.0
    %1624 = vmatpush1.msra.mxu0 0.0
    %1625 = vmatprep.subr.mxu0 0.0
    %1626 = vmatpush1.msra.mxu0 0.0
    %1627 = vmatprep.subr.mxu0 0.0
    %1628 = vmatpush1.msra.mxu0 0.0
    %1629 = vmatprep.subr.mxu0 0.0
    %1630 = vmatpush1.msra.mxu0 0.0
    %1631 = vmatprep.subr.mxu0 0.0
    %1632 = vmatpush1.msra.mxu0 0.0
    %1633 = vmatprep.subr.mxu0 0.0
    %1634 = vmatpush1.msra.mxu0 0.0
    %1635 = vmatprep.subr.mxu0 0.0
    %1636 = vmatpush1.msra.mxu0 0.0
    %1637 = vmatprep.subr.mxu0 0.0
    %1638 = vmatpush1.msra.mxu0 0.0
    %1639 = vmatprep.subr.mxu0 0.0
    %1640 = vmatpush1.msra.mxu0 0.0
    %1641 = vmatprep.subr.mxu0 0.0
    %1642 = vmatpush1.msra.mxu0 0.0
    %1643 = vmatprep.subr.mxu0 0.0
    %1644 = vmatpush1.msra.mxu0 0.0
    %1645 = vmatprep.subr.mxu0 0.0
    %1646 = vmatpush1.msra.mxu0 0.0
    %1647 = vmatprep.subr.mxu0 0.0
    %1648 = vmatpush1.msra.mxu0 0.0
    %1649 = vmatprep.mubr.f32.mxu0 0.0
    %1650 = vmatmul.mubr.f32.gmra.mrb[0].mxu0 %v1583
    %v1651 = vpop.f32.mrb[0].mxu0
    %v1652 = vadd.f32 %v80, %v1651
    %v1653 = vpop.f32.mrb[0].mxu0
    %1654 = vdwg.mxu0
    %v1655 = vsel %vm349, %v1652, -inf
    %1656 = vmax.xlane.f32.xlu0 %v1655
    %v1657 = vpop.xlane.xlu0 %1656
    %v1658 = vsub.f32 %v1652, %v1657
    %v1659 = vmul.f32 %v1658, 1.442695
    %v1660 = vpow.pop %v1659
    %v1661 = vsel %vm349, %v1660, 0.0
    %1662 = vadd.xlane.f32.xlu0 %v1661
    %v1663 = vpop.xlane.xlu0 %1662
    %v1664 = vlog2.pop %v1663
    %v1665 = vmul.f32 %v1664, 0.6931472
    %v1666 = vsub.f32 %v1658, %v1665
    %1667 = vst [vmem:[#allocation8 + $0x5] sm:$0x1] %v1666
    %vm1669 = vcmask 253952
    %1670 = vst.msk [vmem:[#allocation9] sm:$0x1] %vm1669, %v1582
    // Predicated region
    $region38: #{tpu_custom_call.1} parent=1 // pred_check
      _
    $region39: #{tpu_custom_call.1} parent=1 // pred_check_branch
      %1672 = sbr.rel (0) target = $region41
    $region40: #{tpu_custom_call.1} parent=1 // pred_region
      %s1674 = ssub.s32 128, 128
      %1675 = vsyncadd [#allocation4], %s1674
      %s1677 = sshll.u32 [#allocation8], 4
      %s1678 = int_to_ptr.vmem [resolvable:$true] %s1677
      %1680 = dma.vmem_to_hbm [thread:$0]  %s1678, 128, %s6, [#allocation4]
    $region41: #{tpu_custom_call.1} parent=1 // pred_fallthru
      _
    // Predicated region
    $region42: #{tpu_custom_call.1} parent=1 // pred_check
      _
    $region43: #{tpu_custom_call.1} parent=1 // pred_check_branch
      %1682 = sbr.rel (0) target = $region45
    $region44: #{tpu_custom_call.1} parent=1 // pred_region
      %s1684 = ssub.s32 16, 16
      %1685 = vsyncadd [#allocation10], %s1684
      %s1687 = sshll.u32 [#allocation9], 4
      %s1688 = int_to_ptr.vmem [resolvable:$true] %s1687
      %1690 = dma.vmem_to_hbm [thread:$0]  %s1688, 16, %s7, [#allocation10]
    $region45: #{tpu_custom_call.1} parent=1 // pred_fallthru
      _
    // Predicated region
    $region46: #{tpu_custom_call.1} parent=1 // pred_check
      _
    $region47: #{tpu_custom_call.1} parent=1 // pred_check_branch
      %1692 = sbr.rel (0) target = $region49
    $region48: #{tpu_custom_call.1} parent=1 // pred_region
      %1693 = dma.done [#allocation4], 128
    $region49: #{tpu_custom_call.1} parent=1 // pred_fallthru
      _
    // Predicated region
    $region50: #{tpu_custom_call.1} parent=1 // pred_check
      _
    $region51: #{tpu_custom_call.1} parent=1 // pred_check_branch
      %1695 = sbr.rel (0) target = $region53
    $region52: #{tpu_custom_call.1} parent=1 // pred_region
      %1696 = dma.done [#allocation10], 16
    $region53: #{tpu_custom_call.1} parent=1 // pred_fallthru
      _
    %1697 = vsyncpa [#allocation3], 1
    %1698 = vsyncpa [#allocation6], 1
    %1699 = vsyncpa [#allocation4], 1
    %1700 = vsyncpa [#allocation10], 1

</llo_original>
